<compile_context>
chip_gen: v7x
topology: tpu7x:2x2x1
jax: 0.10.0
libtpu: 0.0.40
codegen_flags: <defaults>
</compile_context>

<pallas_src>
import math

import jax
import jax.numpy as jnp
from jax.experimental import pallas as pl
from jax.experimental.pallas import tpu as pltpu


D_MODEL = 8
NUM_HEADS = 1
D_FF = 32
LN_EPS = 1e-5

# Packed bias row layout (lane offsets):
#   [ self_qkv(3D) | self_o(D) | cross_q(D) | cross_kv(2D) | cross_o(D) | ff1(D_FF) | ff2(D) ]
_B_OFF_S_QKV = 0
_B_OFF_S_O = _B_OFF_S_QKV + 3 * D_MODEL
_B_OFF_C_Q = _B_OFF_S_O + D_MODEL
_B_OFF_C_KV = _B_OFF_C_Q + D_MODEL
_B_OFF_C_O = _B_OFF_C_KV + 2 * D_MODEL
_B_OFF_F1 = _B_OFF_C_O + D_MODEL
_B_OFF_F2 = _B_OFF_F1 + D_FF
_B_TOTAL = _B_OFF_F2 + D_MODEL


def decoder_layer_kernel(
    x_ref, enc_ref, tgt_mask_ref, src_mask_ref,
    s_wqkv_ref, s_wo_ref, c_wq_ref, c_wkv_ref, c_wo_ref,
    f_w1_ref, f_w2_ref, bias_ref, ln_ref,
    out_ref,
):
    bblk, S, D = x_ref.shape
    _, Se, _ = enc_ref.shape
    N = bblk * S
    inv_sqrt_dk = 1.0 / math.sqrt(D_MODEL // NUM_HEADS)

    x = x_ref[...].astype(jnp.float32)                       # (b, S, D)
    enc = enc_ref[...].astype(jnp.float32)                   # (b, Se, D)
    # int8 masks -> bool "keep" masks (1 = attend, 0 = mask out).
    tgt_keep = tgt_mask_ref[...].astype(jnp.int32) != 0      # (b, S, S)
    src_keep = src_mask_ref[...].astype(jnp.int32) != 0      # (b, S, Se)

    bias = bias_ref[...]                                     # (1, _B_TOTAL)
    ln = ln_ref[...]                                         # (6, D)

    def bslice(off, width):
        return bias[:, off:off + width]                      # (1, width)

    def layer_norm(v, g_row, b_row):
        # v: (N, D); biased variance (PyTorch LayerNorm semantics).
        mean = jnp.mean(v, axis=-1, keepdims=True)
        var = jnp.mean((v - mean) ** 2, axis=-1, keepdims=True)
        inv = jax.lax.rsqrt(var + LN_EPS)
        return (v - mean) * inv * g_row + b_row

    def softmax_ctx(q3, k3, v3, keep):
        # q3: (b, Sq, D), k3/v3: (b, Sk, D), keep: (b, Sq, Sk) bool.
        # einsum contracts the last dims directly: no transposed copy of K.
        scores = jnp.einsum("bqd,bkd->bqk", q3, k3,
                            preferred_element_type=jnp.float32) * inv_sqrt_dk
        scores = jnp.where(keep, scores, -1e9)
        scores = scores - jnp.max(scores, axis=-1, keepdims=True)
        p = jnp.exp(scores)
        denom = jnp.sum(p, axis=-1, keepdims=True)
        p = p * pl.reciprocal(denom, approx=True)            # EUP, not VALU divide
        return jnp.einsum("bqk,bkd->bqd", p, v3,
                          preferred_element_type=jnp.float32)

    # Flatten batch*seq for all projections / FFN (leading-dim-only reshape,
    # no relayout; fills MXU sublane rows).
    x2 = x.reshape(N, D)

    # --- self attention (fused QKV projection) + residual + norm1 ---
    qkv = jnp.dot(x2, s_wqkv_ref[...], preferred_element_type=jnp.float32)
    qkv = qkv + bslice(_B_OFF_S_QKV, 3 * D)
    q = qkv[:, 0:D].reshape(bblk, S, D)
    k = qkv[:, D:2 * D].reshape(bblk, S, D)
    v = qkv[:, 2 * D:3 * D].reshape(bblk, S, D)
    ctx = softmax_ctx(q, k, v, tgt_keep).reshape(N, D)
    attn = jnp.dot(ctx, s_wo_ref[...], preferred_element_type=jnp.float32)
    attn = attn + bslice(_B_OFF_S_O, D)
    # TODO(synk): dropout is identity here (eval mode); training-mode dropout
    # would need pltpu.prng_* masking.
    x2 = layer_norm(x2 + attn, ln[0:1, :], ln[1:2, :])

    # --- cross attention (fused KV projection) + residual + norm2 ---
    q = jnp.dot(x2, c_wq_ref[...], preferred_element_type=jnp.float32)
    q = (q + bslice(_B_OFF_C_Q, D)).reshape(bblk, S, D)
    enc2 = enc.reshape(bblk * Se, D)
    kv = jnp.dot(enc2, c_wkv_ref[...], preferred_element_type=jnp.float32)
    kv = kv + bslice(_B_OFF_C_KV, 2 * D)
    k = kv[:, 0:D].reshape(bblk, Se, D)
    v = kv[:, D:2 * D].reshape(bblk, Se, D)
    ctx = softmax_ctx(q, k, v, src_keep).reshape(N, D)
    attn = jnp.dot(ctx, c_wo_ref[...], preferred_element_type=jnp.float32)
    attn = attn + bslice(_B_OFF_C_O, D)
    x2 = layer_norm(x2 + attn, ln[2:3, :], ln[3:4, :])

    # --- position-wise feed-forward + residual + norm3 ---
    h = jnp.dot(x2, f_w1_ref[...], preferred_element_type=jnp.float32)
    h = jnp.maximum(h + bslice(_B_OFF_F1, D_FF), 0.0)
    ff = jnp.dot(h, f_w2_ref[...], preferred_element_type=jnp.float32)
    ff = ff + bslice(_B_OFF_F2, D)
    x2 = layer_norm(x2 + ff, ln[4:5, :], ln[5:6, :])

    out_ref[...] = x2.reshape(bblk, S, D).astype(out_ref.dtype)


def _full_spec(shape):
    # Whole parameter array resident; same block for every grid step.
    nd = len(shape)
    return pl.BlockSpec(shape, lambda b, _nd=nd: (0,) * _nd)


def decoder_layer(x, enc_output, src_mask, tgt_mask, kernel_params, *, b_block=None):
    """x: (B, S, D), enc_output: (B, Se, D), masks: (B, S, S) / (B, S, Se).

    kernel_params: output of pack_params().  By default the whole batch is
    processed in a single grid step (b_block = B).
    """
    B, S, D = x.shape
    _, Se, _ = enc_output.shape
    b_blk = B if b_block is None else min(b_block, B)
    assert B % b_blk == 0, "B must be divisible by b_block"

    # masks as int8 (0/1): 4x fewer bytes than f32 per grid step.
    tgt_i8 = (tgt_mask != 0).astype(jnp.int8)
    src_i8 = (src_mask != 0).astype(jnp.int8)

    data_specs = [
        pl.BlockSpec((b_blk, S, D), lambda b: (b, 0, 0)),    # x
        pl.BlockSpec((b_blk, Se, D), lambda b: (b, 0, 0)),   # enc_output
        pl.BlockSpec((b_blk, S, S), lambda b: (b, 0, 0)),    # tgt_mask (int8)
        pl.BlockSpec((b_blk, S, Se), lambda b: (b, 0, 0)),   # src_mask (int8)
    ]
    param_specs = [_full_spec(p.shape) for p in kernel_params]

    # NOTE(v7x): with B == 1 one would add a seq-tile "parallel" grid axis so
    # both TensorCores get work; at these toy sizes a single step is fastest.
    out = pl.pallas_call(
        decoder_layer_kernel,
        out_shape=jax.ShapeDtypeStruct((B, S, D), x.dtype),
        grid_spec=pltpu.PrefetchScalarGridSpec(
            num_scalar_prefetch=0,
            grid=(B // b_blk,),
            in_specs=data_specs + param_specs,
            out_specs=pl.BlockSpec((b_blk, S, D), lambda b: (b, 0, 0)),
        ),
        compiler_params=pltpu.CompilerParams(
            dimension_semantics=("parallel",)),
    )(x, enc_output, tgt_i8, src_i8, *kernel_params)
    return out


def init_params(key, d_model=D_MODEL, d_ff=D_FF):
    """Logical (unpacked) parameters; linear weights stored as (in, out)."""
    keys = jax.random.split(key, 20)
    ki = iter(keys)

    def linear(in_f, out_f):
        w = jax.random.normal(next(ki), (in_f, out_f), jnp.float32) * 0.1
        b = jax.random.normal(next(ki), (1, out_f), jnp.float32) * 0.1
        return w, b

    params = []
    for _ in range(4):            # self-attn: Wq, Wk, Wv, Wo
        params.extend(linear(d_model, d_model))
    for _ in range(4):            # cross-attn: Wq, Wk, Wv, Wo
        params.extend(linear(d_model, d_model))
    params.extend(linear(d_model, d_ff))
    params.extend(linear(d_ff, d_model))
    for _ in range(3):            # LayerNorms (PyTorch init: gamma=1, beta=0)
        params.append(jnp.ones((1, d_model), jnp.float32))
        params.append(jnp.zeros((1, d_model), jnp.float32))
    return params


def pack_params(params):
    """Pack 26 logical arrays into 9 kernel buffers (fused QKV / KV, packed
    bias row, packed LayerNorm table)."""
    (s_wq, s_bq, s_wk, s_bk, s_wv, s_bv, s_wo, s_bo,
     c_wq, c_bq, c_wk, c_bk, c_wv, c_bv, c_wo, c_bo,
     f_w1, f_b1, f_w2, f_b2,
     n1_g, n1_b, n2_g, n2_b, n3_g, n3_b) = params

    s_wqkv = jnp.concatenate([s_wq, s_wk, s_wv], axis=1)      # (D, 3D)
    c_wkv = jnp.concatenate([c_wk, c_wv], axis=1)             # (D, 2D)
    bias = jnp.concatenate(
        [s_bq, s_bk, s_bv, s_bo, c_bq, c_bk, c_bv, c_bo, f_b1, f_b2],
        axis=1)                                               # (1, _B_TOTAL)
    assert bias.shape[1] == _B_TOTAL
    ln = jnp.concatenate([n1_g, n1_b, n2_g, n2_b, n3_g, n3_b], axis=0)  # (6, D)
    return [s_wqkv, s_wo, c_wq, c_wkv, c_wo, f_w1, f_w2, bias, ln]


def decoder_layer_reference(x, enc, src_mask, tgt_mask, params):
    """Pure-JAX reference mirroring the PyTorch module (eval mode)."""
    (s_wq, s_bq, s_wk, s_bk, s_wv, s_bv, s_wo, s_bo,
     c_wq, c_bq, c_wk, c_bk, c_wv, c_bv, c_wo, c_bo,
     f_w1, f_b1, f_w2, f_b2,
     n1_g, n1_b, n2_g, n2_b, n3_g, n3_b) = params
    d_k = D_MODEL // NUM_HEADS

    def ln(v, g, b):
        m = jnp.mean(v, -1, keepdims=True)
        var = jnp.mean((v - m) ** 2, -1, keepdims=True)
        return (v - m) / jnp.sqrt(var + LN_EPS) * g + b

    def attn(q_in, kv_in, mask, wq, bq, wk, bk, wv, bv, wo, bo):
        q = q_in @ wq + bq
        k = kv_in @ wk + bk
        v = kv_in @ wv + bv
        s = jnp.einsum("bqd,bkd->bqk", q, k) / math.sqrt(d_k)
        s = jnp.where(mask == 0, -1e9, s)
        p = jax.nn.softmax(s, axis=-1)
        return jnp.einsum("bqk,bkd->bqd", p, v) @ wo + bo

    h = ln(x + attn(x, x, tgt_mask, s_wq, s_bq, s_wk, s_bk, s_wv, s_bv, s_wo, s_bo),
           n1_g, n1_b)
    h = ln(h + attn(h, enc, src_mask, c_wq, c_bq, c_wk, c_bk, c_wv, c_bv, c_wo, c_bo),
           n2_g, n2_b)
    ff = jnp.maximum(h @ f_w1 + f_b1, 0.0) @ f_w2 + f_b2
    return ln(h + ff, n3_g, n3_b)


if __name__ == "__main__":
    key = jax.random.PRNGKey(0)
    k_x, k_enc, k_p = jax.random.split(key, 3)

    B, S, Se = 2, 8, 8
    x = jax.random.normal(k_x, (B, S, D_MODEL), jnp.float32)
    enc = jax.random.normal(k_enc, (B, Se, D_MODEL), jnp.float32)

    # causal target mask, all-ones source mask (1 = attend, 0 = masked)
    tgt_mask = jnp.tril(jnp.ones((S, S), jnp.float32))[None].repeat(B, axis=0)
    src_mask = jnp.ones((B, S, Se), jnp.float32)

    params = init_params(k_p)
    kparams = pack_params(params)

    out = decoder_layer(x, enc, src_mask, tgt_mask, kparams)
    out = jax.block_until_ready(out)

    ref = decoder_layer_reference(x, enc, src_mask, tgt_mask, params)
    # slightly loosened tolerance: softmax uses pl.reciprocal(approx=True)
    assert jnp.allclose(out, ref, atol=1e-3, rtol=1e-3), "mismatch vs reference"

    print("KERNEL_OK")
</pallas_src>

<mosaic_0001>
module attributes {stable_mosaic.version = 11 : i64} {
  func.func @decoder_layer_kernel(%arg0: i32, %arg1: memref<2x8x8xf32, #tpu.memory_space<vmem>>, %arg2: memref<2x8x8xf32, #tpu.memory_space<vmem>>, %arg3: memref<2x8x8xi8, #tpu.memory_space<vmem>>, %arg4: memref<2x8x8xi8, #tpu.memory_space<vmem>>, %arg5: memref<8x24xf32, #tpu.memory_space<vmem>>, %arg6: memref<8x8xf32, #tpu.memory_space<vmem>>, %arg7: memref<8x8xf32, #tpu.memory_space<vmem>>, %arg8: memref<8x16xf32, #tpu.memory_space<vmem>>, %arg9: memref<8x8xf32, #tpu.memory_space<vmem>>, %arg10: memref<8x32xf32, #tpu.memory_space<vmem>>, %arg11: memref<32x8xf32, #tpu.memory_space<vmem>>, %arg12: memref<1x104xf32, #tpu.memory_space<vmem>>, %arg13: memref<6x8xf32, #tpu.memory_space<vmem>>, %arg14: memref<2x8x8xf32, #tpu.memory_space<vmem>>) attributes {dimension_semantics = [#tpu.dimension_semantics<parallel>], iteration_bounds = array<i64: 1>, scalar_prefetch = 0 : i64, scratch_operands = 0 : i64, tpu.core_type = #tpu.core_type<tc>, window_params = [{transform_indices = @transform_0, window_bounds = array<i64: 2, 8, 8>}, {transform_indices = @transform_1, window_bounds = array<i64: 2, 8, 8>}, {transform_indices = @transform_2, window_bounds = array<i64: 2, 8, 8>}, {transform_indices = @transform_3, window_bounds = array<i64: 2, 8, 8>}, {pipeline_mode = #tpu.pipeline_mode<synchronous>, transform_indices = @transform_4, window_bounds = array<i64: 8, 24>}, {pipeline_mode = #tpu.pipeline_mode<synchronous>, transform_indices = @transform_5, window_bounds = array<i64: 8, 8>}, {pipeline_mode = #tpu.pipeline_mode<synchronous>, transform_indices = @transform_6, window_bounds = array<i64: 8, 8>}, {pipeline_mode = #tpu.pipeline_mode<synchronous>, transform_indices = @transform_7, window_bounds = array<i64: 8, 16>}, {pipeline_mode = #tpu.pipeline_mode<synchronous>, transform_indices = @transform_8, window_bounds = array<i64: 8, 8>}, {pipeline_mode = #tpu.pipeline_mode<synchronous>, transform_indices = @transform_9, window_bounds = array<i64: 8, 32>}, {pipeline_mode = #tpu.pipeline_mode<synchronous>, transform_indices = @transform_10, window_bounds = array<i64: 32, 8>}, {pipeline_mode = #tpu.pipeline_mode<synchronous>, transform_indices = @transform_11, window_bounds = array<i64: 1, 104>}, {pipeline_mode = #tpu.pipeline_mode<synchronous>, transform_indices = @transform_12, window_bounds = array<i64: 6, 8>}, {transform_indices = @transform_13, window_bounds = array<i64: 2, 8, 8>}]} {
    %c0 = arith.constant 0 : index
    %c0_0 = arith.constant 0 : index
    %c0_1 = arith.constant 0 : index
    %0 = vector.load %arg1[%c0, %c0_0, %c0_1] : memref<2x8x8xf32, #tpu.memory_space<vmem>>, vector<2x8x8xf32>
    %c0_2 = arith.constant 0 : index
    %c0_3 = arith.constant 0 : index
    %c0_4 = arith.constant 0 : index
    %1 = vector.load %arg2[%c0_2, %c0_3, %c0_4] : memref<2x8x8xf32, #tpu.memory_space<vmem>>, vector<2x8x8xf32>
    %c0_5 = arith.constant 0 : index
    %c0_6 = arith.constant 0 : index
    %c0_7 = arith.constant 0 : index
    %2 = vector.load %arg3[%c0_5, %c0_6, %c0_7] : memref<2x8x8xi8, #tpu.memory_space<vmem>>, vector<2x8x8xi8>
    %3 = arith.extsi %2 : vector<2x8x8xi8> to vector<2x8x8xi32>
    %c0_i32 = arith.constant 0 : i32
    %4 = vector.broadcast %c0_i32 : i32 to vector<2x8x8xi32>
    %5 = arith.cmpi ne, %3, %4 : vector<2x8x8xi32>
    %c0_8 = arith.constant 0 : index
    %c0_9 = arith.constant 0 : index
    %c0_10 = arith.constant 0 : index
    %6 = vector.load %arg4[%c0_8, %c0_9, %c0_10] : memref<2x8x8xi8, #tpu.memory_space<vmem>>, vector<2x8x8xi8>
    %7 = arith.extsi %6 : vector<2x8x8xi8> to vector<2x8x8xi32>
    %c0_i32_11 = arith.constant 0 : i32
    %8 = vector.broadcast %c0_i32_11 : i32 to vector<2x8x8xi32>
    %9 = arith.cmpi ne, %7, %8 : vector<2x8x8xi32>
    %c0_12 = arith.constant 0 : index
    %c0_13 = arith.constant 0 : index
    %10 = vector.load %arg12[%c0_12, %c0_13] : memref<1x104xf32, #tpu.memory_space<vmem>>, vector<1x104xf32>
    %c0_14 = arith.constant 0 : index
    %c0_15 = arith.constant 0 : index
    %11 = vector.load %arg13[%c0_14, %c0_15] : memref<6x8xf32, #tpu.memory_space<vmem>>, vector<6x8xf32>
    %12 = vector.shape_cast %0 : vector<2x8x8xf32> to vector<16x8xf32>
    %c0_16 = arith.constant 0 : index
    %c0_17 = arith.constant 0 : index
    %13 = vector.load %arg5[%c0_16, %c0_17] : memref<8x24xf32, #tpu.memory_space<vmem>>, vector<8x24xf32>
    %cst = arith.constant dense<0.000000e+00> : vector<16x24xf32>
    %14 = tpu.matmul %12, %13, %cst {dimension_numbers = #tpu.dot_dimension_numbers<[1], [0], [0], [1], [0, 0, 1, 1], [], []>} : vector<16x8xf32>, vector<8x24xf32>, vector<16x24xf32> -> vector<16x24xf32>
    %15 = vector.extract_strided_slice %10 {offsets = [0, 0], sizes = [1, 24], strides = [1, 1]} : vector<1x104xf32> to vector<1x24xf32>
    %16 = vector.broadcast %15 : vector<1x24xf32> to vector<16x24xf32>
    %17 = arith.addf %14, %16 : vector<16x24xf32>
    %18 = vector.extract_strided_slice %17 {offsets = [0, 0], sizes = [16, 8], strides = [1, 1]} : vector<16x24xf32> to vector<16x8xf32>
    %19 = vector.shape_cast %18 : vector<16x8xf32> to vector<2x8x8xf32>
    %20 = vector.extract_strided_slice %17 {offsets = [0, 8], sizes = [16, 8], strides = [1, 1]} : vector<16x24xf32> to vector<16x8xf32>
    %21 = vector.shape_cast %20 : vector<16x8xf32> to vector<2x8x8xf32>
    %22 = vector.extract_strided_slice %17 {offsets = [0, 16], sizes = [16, 8], strides = [1, 1]} : vector<16x24xf32> to vector<16x8xf32>
    %23 = vector.shape_cast %22 : vector<16x8xf32> to vector<2x8x8xf32>
    "tpu.trace_start"() <{level = 10 : i32, message = "bqd,bkd->bqk"}> : () -> ()
    %cst_18 = arith.constant dense<0.000000e+00> : vector<2x8x8xf32>
    %24 = tpu.matmul %19, %21, %cst_18 {dimension_numbers = #tpu.dot_dimension_numbers<[2], [2], [1], [1], [0, 0, 0, 1, 1, 1], [0], [0]>} : vector<2x8x8xf32>, vector<2x8x8xf32>, vector<2x8x8xf32> -> vector<2x8x8xf32>
    "tpu.trace_stop"() : () -> ()
    %cst_19 = arith.constant 0.353553385 : f32
    %25 = vector.broadcast %cst_19 : f32 to vector<2x8x8xf32>
    %26 = arith.mulf %24, %25 : vector<2x8x8xf32>
    %cst_20 = arith.constant -1.000000e+09 : f32
    %27 = vector.broadcast %cst_20 : f32 to vector<2x8x8xf32>
    %28 = arith.select %5, %26, %27 : vector<2x8x8xi1>, vector<2x8x8xf32>
    %cst_21 = arith.constant dense<0xFF800000> : vector<2x8xf32>
    %29 = vector.multi_reduction <maximumf>, %28, %cst_21 [2] : vector<2x8x8xf32> to vector<2x8xf32>
    %30 = vector.shape_cast %29 : vector<2x8xf32> to vector<2x8x1xf32>
    %31 = vector.broadcast %30 : vector<2x8x1xf32> to vector<2x8x8xf32>
    %32 = arith.subf %28, %31 : vector<2x8x8xf32>
    %33 = math.exp %32 : vector<2x8x8xf32>
    %cst_22 = arith.constant dense<0.000000e+00> : vector<2x8xf32>
    %34 = vector.multi_reduction <add>, %33, %cst_22 [2] : vector<2x8x8xf32> to vector<2x8xf32>
    %35 = vector.shape_cast %34 : vector<2x8xf32> to vector<2x8x1xf32>
    %36 = tpu.reciprocal %35 {approx = true} : vector<2x8x1xf32> -> vector<2x8x1xf32>
    %37 = vector.broadcast %36 : vector<2x8x1xf32> to vector<2x8x8xf32>
    %38 = arith.mulf %33, %37 : vector<2x8x8xf32>
    "tpu.trace_start"() <{level = 10 : i32, message = "bqk,bkd->bqd"}> : () -> ()
    %cst_23 = arith.constant dense<0.000000e+00> : vector<2x8x8xf32>
    %39 = tpu.matmul %38, %23, %cst_23 {dimension_numbers = #tpu.dot_dimension_numbers<[2], [1], [1], [2], [0, 0, 0, 1, 1, 2], [0], [0]>} : vector<2x8x8xf32>, vector<2x8x8xf32>, vector<2x8x8xf32> -> vector<2x8x8xf32>
    "tpu.trace_stop"() : () -> ()
    %40 = vector.shape_cast %39 : vector<2x8x8xf32> to vector<16x8xf32>
    %c0_24 = arith.constant 0 : index
    %c0_25 = arith.constant 0 : index
    %41 = vector.load %arg6[%c0_24, %c0_25] : memref<8x8xf32, #tpu.memory_space<vmem>>, vector<8x8xf32>
    %cst_26 = arith.constant dense<0.000000e+00> : vector<16x8xf32>
    %42 = tpu.matmul %40, %41, %cst_26 {dimension_numbers = #tpu.dot_dimension_numbers<[1], [0], [0], [1], [0, 0, 1, 1], [], []>} : vector<16x8xf32>, vector<8x8xf32>, vector<16x8xf32> -> vector<16x8xf32>
    %43 = vector.extract_strided_slice %10 {offsets = [0, 24], sizes = [1, 8], strides = [1, 1]} : vector<1x104xf32> to vector<1x8xf32>
    %44 = vector.broadcast %43 : vector<1x8xf32> to vector<16x8xf32>
    %45 = arith.addf %42, %44 : vector<16x8xf32>
    %46 = arith.addf %12, %45 : vector<16x8xf32>
    %47 = vector.extract_strided_slice %11 {offsets = [0, 0], sizes = [1, 8], strides = [1, 1]} : vector<6x8xf32> to vector<1x8xf32>
    %48 = vector.extract_strided_slice %11 {offsets = [1, 0], sizes = [1, 8], strides = [1, 1]} : vector<6x8xf32> to vector<1x8xf32>
    %cst_27 = arith.constant dense<0.000000e+00> : vector<16xf32>
    %49 = vector.multi_reduction <add>, %46, %cst_27 [1] : vector<16x8xf32> to vector<16xf32>
    %50 = vector.shape_cast %49 : vector<16xf32> to vector<16x1xf32>
    %cst_28 = arith.constant 8.000000e+00 : f32
    %51 = vector.broadcast %cst_28 : f32 to vector<16x1xf32>
    %52 = arith.divf %50, %51 : vector<16x1xf32>
    %53 = vector.broadcast %52 : vector<16x1xf32> to vector<16x8xf32>
    %54 = arith.subf %46, %53 : vector<16x8xf32>
    %55 = arith.mulf %54, %54 : vector<16x8xf32>
    %cst_29 = arith.constant dense<0.000000e+00> : vector<16xf32>
    %56 = vector.multi_reduction <add>, %55, %cst_29 [1] : vector<16x8xf32> to vector<16xf32>
    %57 = vector.shape_cast %56 : vector<16xf32> to vector<16x1xf32>
    %cst_30 = arith.constant 8.000000e+00 : f32
    %58 = vector.broadcast %cst_30 : f32 to vector<16x1xf32>
    %59 = arith.divf %57, %58 : vector<16x1xf32>
    %cst_31 = arith.constant 9.99999974E-6 : f32
    %60 = vector.broadcast %cst_31 : f32 to vector<16x1xf32>
    %61 = arith.addf %59, %60 : vector<16x1xf32>
    %62 = math.rsqrt %61 : vector<16x1xf32>
    %63 = vector.broadcast %52 : vector<16x1xf32> to vector<16x8xf32>
    %64 = arith.subf %46, %63 : vector<16x8xf32>
    %65 = vector.broadcast %62 : vector<16x1xf32> to vector<16x8xf32>
    %66 = arith.mulf %64, %65 : vector<16x8xf32>
    %67 = vector.broadcast %47 : vector<1x8xf32> to vector<16x8xf32>
    %68 = arith.mulf %66, %67 : vector<16x8xf32>
    %69 = vector.broadcast %48 : vector<1x8xf32> to vector<16x8xf32>
    %70 = arith.addf %68, %69 : vector<16x8xf32>
    %c0_32 = arith.constant 0 : index
    %c0_33 = arith.constant 0 : index
    %71 = vector.load %arg7[%c0_32, %c0_33] : memref<8x8xf32, #tpu.memory_space<vmem>>, vector<8x8xf32>
    %cst_34 = arith.constant dense<0.000000e+00> : vector<16x8xf32>
    %72 = tpu.matmul %70, %71, %cst_34 {dimension_numbers = #tpu.dot_dimension_numbers<[1], [0], [0], [1], [0, 0, 1, 1], [], []>} : vector<16x8xf32>, vector<8x8xf32>, vector<16x8xf32> -> vector<16x8xf32>
    %73 = vector.extract_strided_slice %10 {offsets = [0, 32], sizes = [1, 8], strides = [1, 1]} : vector<1x104xf32> to vector<1x8xf32>
    %74 = vector.broadcast %73 : vector<1x8xf32> to vector<16x8xf32>
    %75 = arith.addf %72, %74 : vector<16x8xf32>
    %76 = vector.shape_cast %75 : vector<16x8xf32> to vector<2x8x8xf32>
    %77 = vector.shape_cast %1 : vector<2x8x8xf32> to vector<16x8xf32>
    %c0_35 = arith.constant 0 : index
    %c0_36 = arith.constant 0 : index
    %78 = vector.load %arg8[%c0_35, %c0_36] : memref<8x16xf32, #tpu.memory_space<vmem>>, vector<8x16xf32>
    %cst_37 = arith.constant dense<0.000000e+00> : vector<16x16xf32>
    %79 = tpu.matmul %77, %78, %cst_37 {dimension_numbers = #tpu.dot_dimension_numbers<[1], [0], [0], [1], [0, 0, 1, 1], [], []>} : vector<16x8xf32>, vector<8x16xf32>, vector<16x16xf32> -> vector<16x16xf32>
    %80 = vector.extract_strided_slice %10 {offsets = [0, 40], sizes = [1, 16], strides = [1, 1]} : vector<1x104xf32> to vector<1x16xf32>
    %81 = vector.broadcast %80 : vector<1x16xf32> to vector<16x16xf32>
    %82 = arith.addf %79, %81 : vector<16x16xf32>
    %83 = vector.extract_strided_slice %82 {offsets = [0, 0], sizes = [16, 8], strides = [1, 1]} : vector<16x16xf32> to vector<16x8xf32>
    %84 = vector.shape_cast %83 : vector<16x8xf32> to vector<2x8x8xf32>
    %85 = vector.extract_strided_slice %82 {offsets = [0, 8], sizes = [16, 8], strides = [1, 1]} : vector<16x16xf32> to vector<16x8xf32>
    %86 = vector.shape_cast %85 : vector<16x8xf32> to vector<2x8x8xf32>
    "tpu.trace_start"() <{level = 10 : i32, message = "bqd,bkd->bqk"}> : () -> ()
    %cst_38 = arith.constant dense<0.000000e+00> : vector<2x8x8xf32>
    %87 = tpu.matmul %76, %84, %cst_38 {dimension_numbers = #tpu.dot_dimension_numbers<[2], [2], [1], [1], [0, 0, 0, 1, 1, 1], [0], [0]>} : vector<2x8x8xf32>, vector<2x8x8xf32>, vector<2x8x8xf32> -> vector<2x8x8xf32>
    "tpu.trace_stop"() : () -> ()
    %cst_39 = arith.constant 0.353553385 : f32
    %88 = vector.broadcast %cst_39 : f32 to vector<2x8x8xf32>
    %89 = arith.mulf %87, %88 : vector<2x8x8xf32>
    %cst_40 = arith.constant -1.000000e+09 : f32
    %90 = vector.broadcast %cst_40 : f32 to vector<2x8x8xf32>
    %91 = arith.select %9, %89, %90 : vector<2x8x8xi1>, vector<2x8x8xf32>
    %cst_41 = arith.constant dense<0xFF800000> : vector<2x8xf32>
    %92 = vector.multi_reduction <maximumf>, %91, %cst_41 [2] : vector<2x8x8xf32> to vector<2x8xf32>
    %93 = vector.shape_cast %92 : vector<2x8xf32> to vector<2x8x1xf32>
    %94 = vector.broadcast %93 : vector<2x8x1xf32> to vector<2x8x8xf32>
    %95 = arith.subf %91, %94 : vector<2x8x8xf32>
    %96 = math.exp %95 : vector<2x8x8xf32>
    %cst_42 = arith.constant dense<0.000000e+00> : vector<2x8xf32>
    %97 = vector.multi_reduction <add>, %96, %cst_42 [2] : vector<2x8x8xf32> to vector<2x8xf32>
    %98 = vector.shape_cast %97 : vector<2x8xf32> to vector<2x8x1xf32>
    %99 = tpu.reciprocal %98 {approx = true} : vector<2x8x1xf32> -> vector<2x8x1xf32>
    %100 = vector.broadcast %99 : vector<2x8x1xf32> to vector<2x8x8xf32>
    %101 = arith.mulf %96, %100 : vector<2x8x8xf32>
    "tpu.trace_start"() <{level = 10 : i32, message = "bqk,bkd->bqd"}> : () -> ()
    %cst_43 = arith.constant dense<0.000000e+00> : vector<2x8x8xf32>
    %102 = tpu.matmul %101, %86, %cst_43 {dimension_numbers = #tpu.dot_dimension_numbers<[2], [1], [1], [2], [0, 0, 0, 1, 1, 2], [0], [0]>} : vector<2x8x8xf32>, vector<2x8x8xf32>, vector<2x8x8xf32> -> vector<2x8x8xf32>
    "tpu.trace_stop"() : () -> ()
    %103 = vector.shape_cast %102 : vector<2x8x8xf32> to vector<16x8xf32>
    %c0_44 = arith.constant 0 : index
    %c0_45 = arith.constant 0 : index
    %104 = vector.load %arg9[%c0_44, %c0_45] : memref<8x8xf32, #tpu.memory_space<vmem>>, vector<8x8xf32>
    %cst_46 = arith.constant dense<0.000000e+00> : vector<16x8xf32>
    %105 = tpu.matmul %103, %104, %cst_46 {dimension_numbers = #tpu.dot_dimension_numbers<[1], [0], [0], [1], [0, 0, 1, 1], [], []>} : vector<16x8xf32>, vector<8x8xf32>, vector<16x8xf32> -> vector<16x8xf32>
    %106 = vector.extract_strided_slice %10 {offsets = [0, 56], sizes = [1, 8], strides = [1, 1]} : vector<1x104xf32> to vector<1x8xf32>
    %107 = vector.broadcast %106 : vector<1x8xf32> to vector<16x8xf32>
    %108 = arith.addf %105, %107 : vector<16x8xf32>
    %109 = arith.addf %70, %108 : vector<16x8xf32>
    %110 = vector.extract_strided_slice %11 {offsets = [2, 0], sizes = [1, 8], strides = [1, 1]} : vector<6x8xf32> to vector<1x8xf32>
    %111 = vector.extract_strided_slice %11 {offsets = [3, 0], sizes = [1, 8], strides = [1, 1]} : vector<6x8xf32> to vector<1x8xf32>
    %cst_47 = arith.constant dense<0.000000e+00> : vector<16xf32>
    %112 = vector.multi_reduction <add>, %109, %cst_47 [1] : vector<16x8xf32> to vector<16xf32>
    %113 = vector.shape_cast %112 : vector<16xf32> to vector<16x1xf32>
    %cst_48 = arith.constant 8.000000e+00 : f32
    %114 = vector.broadcast %cst_48 : f32 to vector<16x1xf32>
    %115 = arith.divf %113, %114 : vector<16x1xf32>
    %116 = vector.broadcast %115 : vector<16x1xf32> to vector<16x8xf32>
    %117 = arith.subf %109, %116 : vector<16x8xf32>
    %118 = arith.mulf %117, %117 : vector<16x8xf32>
    %cst_49 = arith.constant dense<0.000000e+00> : vector<16xf32>
    %119 = vector.multi_reduction <add>, %118, %cst_49 [1] : vector<16x8xf32> to vector<16xf32>
    %120 = vector.shape_cast %119 : vector<16xf32> to vector<16x1xf32>
    %cst_50 = arith.constant 8.000000e+00 : f32
    %121 = vector.broadcast %cst_50 : f32 to vector<16x1xf32>
    %122 = arith.divf %120, %121 : vector<16x1xf32>
    %cst_51 = arith.constant 9.99999974E-6 : f32
    %123 = vector.broadcast %cst_51 : f32 to vector<16x1xf32>
    %124 = arith.addf %122, %123 : vector<16x1xf32>
    %125 = math.rsqrt %124 : vector<16x1xf32>
    %126 = vector.broadcast %115 : vector<16x1xf32> to vector<16x8xf32>
    %127 = arith.subf %109, %126 : vector<16x8xf32>
    %128 = vector.broadcast %125 : vector<16x1xf32> to vector<16x8xf32>
    %129 = arith.mulf %127, %128 : vector<16x8xf32>
    %130 = vector.broadcast %110 : vector<1x8xf32> to vector<16x8xf32>
    %131 = arith.mulf %129, %130 : vector<16x8xf32>
    %132 = vector.broadcast %111 : vector<1x8xf32> to vector<16x8xf32>
    %133 = arith.addf %131, %132 : vector<16x8xf32>
    %c0_52 = arith.constant 0 : index
    %c0_53 = arith.constant 0 : index
    %134 = vector.load %arg10[%c0_52, %c0_53] : memref<8x32xf32, #tpu.memory_space<vmem>>, vector<8x32xf32>
    %cst_54 = arith.constant dense<0.000000e+00> : vector<16x32xf32>
    %135 = tpu.matmul %133, %134, %cst_54 {dimension_numbers = #tpu.dot_dimension_numbers<[1], [0], [0], [1], [0, 0, 1, 1], [], []>} : vector<16x8xf32>, vector<8x32xf32>, vector<16x32xf32> -> vector<16x32xf32>
    %136 = vector.extract_strided_slice %10 {offsets = [0, 64], sizes = [1, 32], strides = [1, 1]} : vector<1x104xf32> to vector<1x32xf32>
    %137 = vector.broadcast %136 : vector<1x32xf32> to vector<16x32xf32>
    %138 = arith.addf %135, %137 : vector<16x32xf32>
    %cst_55 = arith.constant 0.000000e+00 : f32
    %139 = vector.broadcast %cst_55 : f32 to vector<16x32xf32>
    %140 = arith.maximumf %138, %139 : vector<16x32xf32>
    %c0_56 = arith.constant 0 : index
    %c0_57 = arith.constant 0 : index
    %141 = vector.load %arg11[%c0_56, %c0_57] : memref<32x8xf32, #tpu.memory_space<vmem>>, vector<32x8xf32>
    %cst_58 = arith.constant dense<0.000000e+00> : vector<16x8xf32>
    %142 = tpu.matmul %140, %141, %cst_58 {dimension_numbers = #tpu.dot_dimension_numbers<[1], [0], [0], [1], [0, 0, 1, 1], [], []>} : vector<16x32xf32>, vector<32x8xf32>, vector<16x8xf32> -> vector<16x8xf32>
    %143 = vector.extract_strided_slice %10 {offsets = [0, 96], sizes = [1, 8], strides = [1, 1]} : vector<1x104xf32> to vector<1x8xf32>
    %144 = vector.broadcast %143 : vector<1x8xf32> to vector<16x8xf32>
    %145 = arith.addf %142, %144 : vector<16x8xf32>
    %146 = arith.addf %133, %145 : vector<16x8xf32>
    %147 = vector.extract_strided_slice %11 {offsets = [4, 0], sizes = [1, 8], strides = [1, 1]} : vector<6x8xf32> to vector<1x8xf32>
    %148 = vector.extract_strided_slice %11 {offsets = [5, 0], sizes = [1, 8], strides = [1, 1]} : vector<6x8xf32> to vector<1x8xf32>
    %cst_59 = arith.constant dense<0.000000e+00> : vector<16xf32>
    %149 = vector.multi_reduction <add>, %146, %cst_59 [1] : vector<16x8xf32> to vector<16xf32>
    %150 = vector.shape_cast %149 : vector<16xf32> to vector<16x1xf32>
    %cst_60 = arith.constant 8.000000e+00 : f32
    %151 = vector.broadcast %cst_60 : f32 to vector<16x1xf32>
    %152 = arith.divf %150, %151 : vector<16x1xf32>
    %153 = vector.broadcast %152 : vector<16x1xf32> to vector<16x8xf32>
    %154 = arith.subf %146, %153 : vector<16x8xf32>
    %155 = arith.mulf %154, %154 : vector<16x8xf32>
    %cst_61 = arith.constant dense<0.000000e+00> : vector<16xf32>
    %156 = vector.multi_reduction <add>, %155, %cst_61 [1] : vector<16x8xf32> to vector<16xf32>
    %157 = vector.shape_cast %156 : vector<16xf32> to vector<16x1xf32>
    %cst_62 = arith.constant 8.000000e+00 : f32
    %158 = vector.broadcast %cst_62 : f32 to vector<16x1xf32>
    %159 = arith.divf %157, %158 : vector<16x1xf32>
    %cst_63 = arith.constant 9.99999974E-6 : f32
    %160 = vector.broadcast %cst_63 : f32 to vector<16x1xf32>
    %161 = arith.addf %159, %160 : vector<16x1xf32>
    %162 = math.rsqrt %161 : vector<16x1xf32>
    %163 = vector.broadcast %152 : vector<16x1xf32> to vector<16x8xf32>
    %164 = arith.subf %146, %163 : vector<16x8xf32>
    %165 = vector.broadcast %162 : vector<16x1xf32> to vector<16x8xf32>
    %166 = arith.mulf %164, %165 : vector<16x8xf32>
    %167 = vector.broadcast %147 : vector<1x8xf32> to vector<16x8xf32>
    %168 = arith.mulf %166, %167 : vector<16x8xf32>
    %169 = vector.broadcast %148 : vector<1x8xf32> to vector<16x8xf32>
    %170 = arith.addf %168, %169 : vector<16x8xf32>
    %171 = vector.shape_cast %170 : vector<16x8xf32> to vector<2x8x8xf32>
    %c0_64 = arith.constant 0 : index
    %c0_65 = arith.constant 0 : index
    %c0_66 = arith.constant 0 : index
    %172 = vector.load %arg14[%c0_64, %c0_65, %c0_66] : memref<2x8x8xf32, #tpu.memory_space<vmem>>, vector<2x8x8xf32>
    tpu.vector_store %arg14[%c0_64, %c0_65, %c0_66], %171 {strides = array<i32>} : memref<2x8x8xf32, #tpu.memory_space<vmem>>, vector<2x8x8xf32>,
    return
  }
  func.func @transform_0(%arg0: i32) -> (i32, i32, i32) {
    %c0_i32 = arith.constant 0 : i32
    %c0_i32_0 = arith.constant 0 : i32
    %c0_i32_1 = arith.constant 0 : i32
    return %arg0, %c0_i32, %c0_i32_0 : i32, i32, i32
  }
  func.func @transform_1(%arg0: i32) -> (i32, i32, i32) {
    %c0_i32 = arith.constant 0 : i32
    %c0_i32_0 = arith.constant 0 : i32
    %c0_i32_1 = arith.constant 0 : i32
    return %arg0, %c0_i32, %c0_i32_0 : i32, i32, i32
  }
  func.func @transform_2(%arg0: i32) -> (i32, i32, i32) {
    %c0_i32 = arith.constant 0 : i32
    %c0_i32_0 = arith.constant 0 : i32
    %c0_i32_1 = arith.constant 0 : i32
    return %arg0, %c0_i32, %c0_i32_0 : i32, i32, i32
  }
  func.func @transform_3(%arg0: i32) -> (i32, i32, i32) {
    %c0_i32 = arith.constant 0 : i32
    %c0_i32_0 = arith.constant 0 : i32
    %c0_i32_1 = arith.constant 0 : i32
    return %arg0, %c0_i32, %c0_i32_0 : i32, i32, i32
  }
  func.func @transform_4(%arg0: i32) -> (i32, i32) {
    %c0_i32 = arith.constant 0 : i32
    %c0_i32_0 = arith.constant 0 : i32
    %c0_i32_1 = arith.constant 0 : i32
    return %c0_i32, %c0_i32_0 : i32, i32
  }
  func.func @transform_5(%arg0: i32) -> (i32, i32) {
    %c0_i32 = arith.constant 0 : i32
    %c0_i32_0 = arith.constant 0 : i32
    %c0_i32_1 = arith.constant 0 : i32
    return %c0_i32, %c0_i32_0 : i32, i32
  }
  func.func @transform_6(%arg0: i32) -> (i32, i32) {
    %c0_i32 = arith.constant 0 : i32
    %c0_i32_0 = arith.constant 0 : i32
    %c0_i32_1 = arith.constant 0 : i32
    return %c0_i32, %c0_i32_0 : i32, i32
  }
  func.func @transform_7(%arg0: i32) -> (i32, i32) {
    %c0_i32 = arith.constant 0 : i32
    %c0_i32_0 = arith.constant 0 : i32
    %c0_i32_1 = arith.constant 0 : i32
    return %c0_i32, %c0_i32_0 : i32, i32
  }
  func.func @transform_8(%arg0: i32) -> (i32, i32) {
    %c0_i32 = arith.constant 0 : i32
    %c0_i32_0 = arith.constant 0 : i32
    %c0_i32_1 = arith.constant 0 : i32
    return %c0_i32, %c0_i32_0 : i32, i32
  }
  func.func @transform_9(%arg0: i32) -> (i32, i32) {
    %c0_i32 = arith.constant 0 : i32
    %c0_i32_0 = arith.constant 0 : i32
    %c0_i32_1 = arith.constant 0 : i32
    return %c0_i32, %c0_i32_0 : i32, i32
  }
  func.func @transform_10(%arg0: i32) -> (i32, i32) {
    %c0_i32 = arith.constant 0 : i32
    %c0_i32_0 = arith.constant 0 : i32
    %c0_i32_1 = arith.constant 0 : i32
    return %c0_i32, %c0_i32_0 : i32, i32
  }
  func.func @transform_11(%arg0: i32) -> (i32, i32) {
    %c0_i32 = arith.constant 0 : i32
    %c0_i32_0 = arith.constant 0 : i32
    %c0_i32_1 = arith.constant 0 : i32
    return %c0_i32, %c0_i32_0 : i32, i32
  }
  func.func @transform_12(%arg0: i32) -> (i32, i32) {
    %c0_i32 = arith.constant 0 : i32
    %c0_i32_0 = arith.constant 0 : i32
    %c0_i32_1 = arith.constant 0 : i32
    return %c0_i32, %c0_i32_0 : i32, i32
  }
  func.func @transform_13(%arg0: i32) -> (i32, i32, i32) {
    %c0_i32 = arith.constant 0 : i32
    %c0_i32_0 = arith.constant 0 : i32
    %c0_i32_1 = arith.constant 0 : i32
    return %arg0, %c0_i32, %c0_i32_0 : i32, i32, i32
  }
}

</mosaic_0001>

<llo_original>
// kernel: tpu_custom_call.1
$region0: #{tpu_custom_call.1}
  #allocation0 [shape = 'u32[]', space=smem, size = 0x4, offset = 0x4, fixed_abs, tag = 'smem constant byte address 0x4 - core index']
  #allocation1 [shape = 'u32[144,128]{1,0:T(1,128)}', space=vmem, size = 0x12000, scoped, tag = 'internal scratch']
  %s0 = inlined_call_operand.vmem [shape: f32[2,8,8], index: 0, kind: input, shape index: {}]
  %s1 = inlined_call_operand.vmem [shape: f32[2,8,8], index: 1, kind: input, shape index: {}]
  %s2 = inlined_call_operand.hbm [shape: s8[2,8,8], index: 2, kind: input, shape index: {}]
  %s3 = inlined_call_operand.hbm [shape: s8[2,8,8], index: 3, kind: input, shape index: {}]
  %s4 = inlined_call_operand.vmem [shape: f32[8,24], index: 4, kind: input, shape index: {}]
  %s5 = inlined_call_operand.vmem [shape: f32[8,8], index: 5, kind: input, shape index: {}]
  %s6 = inlined_call_operand.hbm [shape: f32[8,8], index: 6, kind: input, shape index: {}]
  %s7 = inlined_call_operand.vmem [shape: f32[8,16], index: 7, kind: input, shape index: {}]
  %s8 = inlined_call_operand.hbm [shape: f32[8,8], index: 8, kind: input, shape index: {}]
  %s9 = inlined_call_operand.vmem [shape: f32[8,32], index: 9, kind: input, shape index: {}]
  %s10 = inlined_call_operand.vmem [shape: f32[32,8], index: 10, kind: input, shape index: {}]
  %s11 = inlined_call_operand.vmem [shape: f32[1,104], index: 11, kind: input, shape index: {}]
  %s12 = inlined_call_operand.vmem [shape: f32[6,8], index: 12, kind: input, shape index: {}]
  %s13 = inlined_call_operand.hbm [shape: f32[2,8,8], index: 13, kind: output, shape index: {}]
  %s14 = sld [smem:[#allocation0]]
  $region78: #{tpu_custom_call.1} parent=0
    _
  %s16 = ssub.s32 1, %s14
  %s17 = scalar_select 0, %s16, %s14
  $region1: #{tpu_custom_call.1} parent=0
    #allocation2 [shape = 'u8[2048]{0}', space=vmem, size = 0x800, scoped, tag = 'input window, operand 2, single buffered']
    #allocation3 [shape = 's32[1]{0}', space=sflag, size = 0x4, scoped, tag = 'scoped memory for tpu_custom_call.1']
    #allocation4 [shape = 's32[1]{0}', space=sflag, size = 0x4, scoped, tag = 'scoped memory for tpu_custom_call.1']
    #allocation5 [shape = 'u8[2048]{0}', space=vmem, size = 0x800, scoped, tag = 'input window, operand 3, single buffered']
    #allocation6 [shape = 's32[1]{0}', space=sflag, size = 0x4, scoped, tag = 'scoped memory for tpu_custom_call.1']
    #allocation7 [shape = 'u8[4096]{0}', space=vmem, size = 0x1000, scoped, tag = 'input window, operand 6, single buffered']
    #allocation8 [shape = 'u8[4096]{0}', space=vmem, size = 0x1000, scoped, tag = 'input window, operand 8, single buffered']
    #allocation9 [shape = 's32[1]{0}', space=sflag, size = 0x4, scoped, tag = 'scoped memory for tpu_custom_call.1']
    #allocation10 [shape = 'u8[8192]{0}', space=vmem, size = 0x2000, scoped, tag = 'output window, operand 0, single buffered']
    %18 = vsyncpa [#allocation3], 0
    %19 = vsyncpa [#allocation6], 0
    %20 = vsyncpa [#allocation9], 0
    %21 = vsyncpa [#allocation4], 0
    // Predicated region
    $region2: #{tpu_custom_call.1} parent=1 // pred_check
      _
    $region3: #{tpu_custom_call.1} parent=1 // pred_check_branch
      %23 = sbr.rel (0) target = $region5
    $region4: #{tpu_custom_call.1} parent=1 // pred_region
      _
    $region5: #{tpu_custom_call.1} parent=1 // pred_fallthru
      _
    // Predicated region
    $region6: #{tpu_custom_call.1} parent=1 // pred_check
      _
    $region7: #{tpu_custom_call.1} parent=1 // pred_check_branch
      %25 = sbr.rel (0) target = $region9
    $region8: #{tpu_custom_call.1} parent=1 // pred_region
      _
    $region9: #{tpu_custom_call.1} parent=1 // pred_fallthru
      _
    // Predicated region
    $region10: #{tpu_custom_call.1} parent=1 // pred_check
      _
    $region11: #{tpu_custom_call.1} parent=1 // pred_check_branch
      %27 = sbr.rel (0) target = $region13
    $region12: #{tpu_custom_call.1} parent=1 // pred_region
      %s29 = ssub.s32 64, 64
      %30 = vsyncadd [#allocation3], %s29
      %s31 = sshll.u32 [#allocation2], 4
      %s32 = int_to_ptr.vmem [resolvable:$true] %s31
      %37 = dma.hbm_to_vmem [thread:$0]  %s2, 64, %s32, [#allocation3], 32, 32, 2
    $region13: #{tpu_custom_call.1} parent=1 // pred_fallthru
      _
    // Predicated region
    $region14: #{tpu_custom_call.1} parent=1 // pred_check
      _
    $region15: #{tpu_custom_call.1} parent=1 // pred_check_branch
      %39 = sbr.rel (0) target = $region17
    $region16: #{tpu_custom_call.1} parent=1 // pred_region
      %s41 = ssub.s32 64, 64
      %42 = vsyncadd [#allocation6], %s41
      %s43 = sshll.u32 [#allocation5], 4
      %s44 = int_to_ptr.vmem [resolvable:$true] %s43
      %49 = dma.hbm_to_vmem [thread:$0]  %s3, 64, %s44, [#allocation6], 32, 32, 2
    $region17: #{tpu_custom_call.1} parent=1 // pred_fallthru
      _
    // Predicated region
    $region18: #{tpu_custom_call.1} parent=1 // pred_check
      _
    $region19: #{tpu_custom_call.1} parent=1 // pred_check_branch
      %51 = sbr.rel (0) target = $region21
    $region20: #{tpu_custom_call.1} parent=1 // pred_region
      _
    $region21: #{tpu_custom_call.1} parent=1 // pred_fallthru
      _
    // Predicated region
    $region22: #{tpu_custom_call.1} parent=1 // pred_check
      _
    $region23: #{tpu_custom_call.1} parent=1 // pred_check_branch
      %53 = sbr.rel (0) target = $region25
    $region24: #{tpu_custom_call.1} parent=1 // pred_region
      _
    $region25: #{tpu_custom_call.1} parent=1 // pred_fallthru
      _
    // Predicated region
    $region26: #{tpu_custom_call.1} parent=1 // pred_check
      _
    $region27: #{tpu_custom_call.1} parent=1 // pred_check_branch
      %55 = sbr.rel (0) target = $region29
    $region28: #{tpu_custom_call.1} parent=1 // pred_region
      %s57 = ssub.s32 128, 128
      %58 = vsyncadd [#allocation6], %s57
      %s60 = sshll.u32 [#allocation7], 4
      %s61 = int_to_ptr.vmem [resolvable:$true] %s60
      %63 = dma.hbm_to_vmem [thread:$0]  %s6, 128, %s61, [#allocation6]
    $region29: #{tpu_custom_call.1} parent=1 // pred_fallthru
      _
    // Predicated region
    $region30: #{tpu_custom_call.1} parent=1 // pred_check
      _
    $region31: #{tpu_custom_call.1} parent=1 // pred_check_branch
      %65 = sbr.rel (0) target = $region33
    $region32: #{tpu_custom_call.1} parent=1 // pred_region
      _
    $region33: #{tpu_custom_call.1} parent=1 // pred_fallthru
      _
    // Predicated region
    $region34: #{tpu_custom_call.1} parent=1 // pred_check
      _
    $region35: #{tpu_custom_call.1} parent=1 // pred_check_branch
      %67 = sbr.rel (0) target = $region37
    $region36: #{tpu_custom_call.1} parent=1 // pred_region
      %s69 = ssub.s32 128, 128
      %70 = vsyncadd [#allocation9], %s69
      %s72 = sshll.u32 [#allocation8], 4
      %s73 = int_to_ptr.vmem [resolvable:$true] %s72
      %75 = dma.hbm_to_vmem [thread:$0]  %s8, 128, %s73, [#allocation9]
    $region37: #{tpu_custom_call.1} parent=1 // pred_fallthru
      _
    // Predicated region
    $region38: #{tpu_custom_call.1} parent=1 // pred_check
      _
    $region39: #{tpu_custom_call.1} parent=1 // pred_check_branch
      %77 = sbr.rel (0) target = $region41
    $region40: #{tpu_custom_call.1} parent=1 // pred_region
      _
    $region41: #{tpu_custom_call.1} parent=1 // pred_fallthru
      _
    // Predicated region
    $region42: #{tpu_custom_call.1} parent=1 // pred_check
      _
    $region43: #{tpu_custom_call.1} parent=1 // pred_check_branch
      %79 = sbr.rel (0) target = $region45
    $region44: #{tpu_custom_call.1} parent=1 // pred_region
      _
    $region45: #{tpu_custom_call.1} parent=1 // pred_fallthru
      _
    // Predicated region
    $region46: #{tpu_custom_call.1} parent=1 // pred_check
      _
    $region47: #{tpu_custom_call.1} parent=1 // pred_check_branch
      %81 = sbr.rel (0) target = $region49
    $region48: #{tpu_custom_call.1} parent=1 // pred_region
      _
    $region49: #{tpu_custom_call.1} parent=1 // pred_fallthru
      _
    // Predicated region
    $region50: #{tpu_custom_call.1} parent=1 // pred_check
      _
    $region51: #{tpu_custom_call.1} parent=1 // pred_check_branch
      %83 = sbr.rel (0) target = $region53
    $region52: #{tpu_custom_call.1} parent=1 // pred_region
      _
    $region53: #{tpu_custom_call.1} parent=1 // pred_fallthru
      _
    // Predicated region
    $region54: #{tpu_custom_call.1} parent=1 // pred_check
      _
    $region55: #{tpu_custom_call.1} parent=1 // pred_check_branch
      %85 = sbr.rel (0) target = $region57
    $region56: #{tpu_custom_call.1} parent=1 // pred_region
      %86 = dma.done [#allocation3], 64
    $region57: #{tpu_custom_call.1} parent=1 // pred_fallthru
      _
    // Predicated region
    $region58: #{tpu_custom_call.1} parent=1 // pred_check
      _
    $region59: #{tpu_custom_call.1} parent=1 // pred_check_branch
      %88 = sbr.rel (0) target = $region61
    $region60: #{tpu_custom_call.1} parent=1 // pred_region
      %89 = dma.done [#allocation6], 64
    $region61: #{tpu_custom_call.1} parent=1 // pred_fallthru
      _
    // Predicated region
    $region62: #{tpu_custom_call.1} parent=1 // pred_check
      _
    $region63: #{tpu_custom_call.1} parent=1 // pred_check_branch
      %91 = sbr.rel (0) target = $region65
    $region64: #{tpu_custom_call.1} parent=1 // pred_region
      %92 = dma.done [#allocation6], 128
    $region65: #{tpu_custom_call.1} parent=1 // pred_fallthru
      _
    // Predicated region
    $region66: #{tpu_custom_call.1} parent=1 // pred_check
      _
    $region67: #{tpu_custom_call.1} parent=1 // pred_check_branch
      %94 = sbr.rel (0) target = $region69
    $region68: #{tpu_custom_call.1} parent=1 // pred_region
      %95 = dma.done [#allocation9], 128
    $region69: #{tpu_custom_call.1} parent=1 // pred_fallthru
      _
    %v96 = vld [vmem:[%s0] sm:$0xff]
    %v97 = vld [vmem:[%s0 + $0x8] sm:$0xff]
    %v98 = vld [vmem:[%s1] sm:$0xff]
    %v99 = vld [vmem:[%s1 + $0x8] sm:$0xff]
    %v100 = vld [vmem:[#allocation2] sm:$0x3]
    %v101 = vld [vmem:[#allocation2 + $0x2] sm:$0x3]
    %v102 = vunpack.c.0.s8 %v100
    %v103 = vunpack.c.0.s8 %v101
    %vm104 = vcmp.ne.s32.totalorder %v102, 0
    %vm105 = vcmp.ne.s32.totalorder %v103, 0
    %v106 = vld [vmem:[#allocation5] sm:$0x3]
    %v107 = vld [vmem:[#allocation5 + $0x2] sm:$0x3]
    %v108 = vunpack.c.0.s8 %v106
    %v109 = vunpack.c.0.s8 %v107
    %vm110 = vcmp.ne.s32.totalorder %v108, 0
    %vm111 = vcmp.ne.s32.totalorder %v109, 0
    %v112 = vld [vmem:[%s11] sm:$0x1]
    %v113 = vld [vmem:[%s12] sm:$0x3f]
    %v114 = vld [vmem:[%s4] sm:$0xff]
    %v116 = vlaneseq
    %v117 = vshrl.u32 %v116, 7
    %v118 = vsub.s32 0, %v117
    %v119 = vrot.slane %v112, %v118
    %vm121 = vcmask 64512
    %v123 = vsel %vm121, %v96, 0
    %v126 = vsel %vm121, %v97, 0
    %128 = vmatprep.subr.mxu0 0.0
    %129 = vmatpush1.msra.mxu0 %v114
    %130 = vmatprep.subr.mxu0 0.0
    %131 = vmatpush1.msra.mxu0 0.0
    %132 = vmatprep.subr.mxu0 0.0
    %133 = vmatpush1.msra.mxu0 0.0
    %134 = vmatprep.subr.mxu0 0.0
    %135 = vmatpush1.msra.mxu0 0.0
    %136 = vmatprep.subr.mxu0 0.0
    %137 = vmatpush1.msra.mxu0 0.0
    %138 = vmatprep.subr.mxu0 0.0
    %139 = vmatpush1.msra.mxu0 0.0
    %140 = vmatprep.subr.mxu0 0.0
    %141 = vmatpush1.msra.mxu0 0.0
    %142 = vmatprep.subr.mxu0 0.0
    %143 = vmatpush1.msra.mxu0 0.0
    %144 = vmatprep.subr.mxu0 0.0
    %145 = vmatpush1.msra.mxu0 0.0
    %146 = vmatprep.subr.mxu0 0.0
    %147 = vmatpush1.msra.mxu0 0.0
    %148 = vmatprep.subr.mxu0 0.0
    %149 = vmatpush1.msra.mxu0 0.0
    %150 = vmatprep.subr.mxu0 0.0
    %151 = vmatpush1.msra.mxu0 0.0
    %152 = vmatprep.subr.mxu0 0.0
    %153 = vmatpush1.msra.mxu0 0.0
    %154 = vmatprep.subr.mxu0 0.0
    %155 = vmatpush1.msra.mxu0 0.0
    %156 = vmatprep.subr.mxu0 0.0
    %157 = vmatpush1.msra.mxu0 0.0
    %158 = vmatprep.subr.mxu0 0.0
    %159 = vmatpush1.msra.mxu0 0.0
    %160 = vmatprep.subr.mxu0 0.0
    %161 = vmatpush1.msra.mxu0 0.0
    %162 = vmatprep.subr.mxu0 0.0
    %163 = vmatpush1.msra.mxu0 0.0
    %164 = vmatprep.subr.mxu0 0.0
    %165 = vmatpush1.msra.mxu0 0.0
    %166 = vmatprep.subr.mxu0 0.0
    %167 = vmatpush1.msra.mxu0 0.0
    %168 = vmatprep.subr.mxu0 0.0
    %169 = vmatpush1.msra.mxu0 0.0
    %170 = vmatprep.subr.mxu0 0.0
    %171 = vmatpush1.msra.mxu0 0.0
    %172 = vmatprep.subr.mxu0 0.0
    %173 = vmatpush1.msra.mxu0 0.0
    %174 = vmatprep.subr.mxu0 0.0
    %175 = vmatpush1.msra.mxu0 0.0
    %176 = vmatprep.subr.mxu0 0.0
    %177 = vmatpush1.msra.mxu0 0.0
    %178 = vmatprep.subr.mxu0 0.0
    %179 = vmatpush1.msra.mxu0 0.0
    %180 = vmatprep.subr.mxu0 0.0
    %181 = vmatpush1.msra.mxu0 0.0
    %182 = vmatprep.subr.mxu0 0.0
    %183 = vmatpush1.msra.mxu0 0.0
    %184 = vmatprep.subr.mxu0 0.0
    %185 = vmatpush1.msra.mxu0 0.0
    %186 = vmatprep.subr.mxu0 0.0
    %187 = vmatpush1.msra.mxu0 0.0
    %188 = vmatprep.subr.mxu0 0.0
    %189 = vmatpush1.msra.mxu0 0.0
    %190 = vmatprep.subr.mxu0 0.0
    %191 = vmatpush1.msra.mxu0 0.0
    %192 = vmatprep.mubr.f32.mxu0 0.0
    %193 = vmatmul.mubr.f32.gmra.mrb[0].mxu0 %v123
    %v194 = vpop.f32.mrb[0].mxu0
    %v195 = vadd.f32 %v119, %v194
    %v196 = vpop.f32.mrb[0].mxu0
    %197 = vmatprep.mubr.f32.mxu0 0.0
    %198 = vmatmul.mubr.f32.gmra.mrb[0].mxu0 %v126
    %v199 = vpop.f32.mrb[0].mxu0
    %v200 = vadd.f32 %v119, %v199
    %v201 = vpop.f32.mrb[0].mxu0
    %202 = vdwg.mxu0
    %204 = vrot.lane.b32.xlu0 %v195, 120
    %v205 = vpop.permute.xlu0 %204
    %v206 = vsel %vm121, %v195, 0
    %v208 = vsel %vm121, %v205, 0
    %210 = vmatprep.subr.mxu0 0.0
    %211 = vmatpush1.xpose.msra.mxu0 %v208
    %212 = vmatprep.subr.mxu0 0.0
    %213 = vmatpush1.xpose.msra.mxu0 0.0
    %214 = vmatprep.subr.mxu0 0.0
    %215 = vmatpush1.xpose.msra.mxu0 0.0
    %216 = vmatprep.subr.mxu0 0.0
    %217 = vmatpush1.xpose.msra.mxu0 0.0
    %218 = vmatprep.subr.mxu0 0.0
    %219 = vmatpush1.xpose.msra.mxu0 0.0
    %220 = vmatprep.subr.mxu0 0.0
    %221 = vmatpush1.xpose.msra.mxu0 0.0
    %222 = vmatprep.subr.mxu0 0.0
    %223 = vmatpush1.xpose.msra.mxu0 0.0
    %224 = vmatprep.subr.mxu0 0.0
    %225 = vmatpush1.xpose.msra.mxu0 0.0
    %226 = vmatprep.subr.mxu0 0.0
    %227 = vmatpush1.xpose.msra.mxu0 0.0
    %228 = vmatprep.subr.mxu0 0.0
    %229 = vmatpush1.xpose.msra.mxu0 0.0
    %230 = vmatprep.subr.mxu0 0.0
    %231 = vmatpush1.xpose.msra.mxu0 0.0
    %232 = vmatprep.subr.mxu0 0.0
    %233 = vmatpush1.xpose.msra.mxu0 0.0
    %234 = vmatprep.subr.mxu0 0.0
    %235 = vmatpush1.xpose.msra.mxu0 0.0
    %236 = vmatprep.subr.mxu0 0.0
    %237 = vmatpush1.xpose.msra.mxu0 0.0
    %238 = vmatprep.subr.mxu0 0.0
    %239 = vmatpush1.xpose.msra.mxu0 0.0
    %240 = vmatprep.subr.mxu0 0.0
    %241 = vmatpush1.xpose.msra.mxu0 0.0
    %242 = vmatprep.subr.mxu0 0.0
    %243 = vmatpush1.xpose.msra.mxu0 0.0
    %244 = vmatprep.subr.mxu0 0.0
    %245 = vmatpush1.xpose.msra.mxu0 0.0
    %246 = vmatprep.subr.mxu0 0.0
    %247 = vmatpush1.xpose.msra.mxu0 0.0
    %248 = vmatprep.subr.mxu0 0.0
    %249 = vmatpush1.xpose.msra.mxu0 0.0
    %250 = vmatprep.subr.mxu0 0.0
    %251 = vmatpush1.xpose.msra.mxu0 0.0
    %252 = vmatprep.subr.mxu0 0.0
    %253 = vmatpush1.xpose.msra.mxu0 0.0
    %254 = vmatprep.subr.mxu0 0.0
    %255 = vmatpush1.xpose.msra.mxu0 0.0
    %256 = vmatprep.subr.mxu0 0.0
    %257 = vmatpush1.xpose.msra.mxu0 0.0
    %258 = vmatprep.subr.mxu0 0.0
    %259 = vmatpush1.xpose.msra.mxu0 0.0
    %260 = vmatprep.subr.mxu0 0.0
    %261 = vmatpush1.xpose.msra.mxu0 0.0
    %262 = vmatprep.subr.mxu0 0.0
    %263 = vmatpush1.xpose.msra.mxu0 0.0
    %264 = vmatprep.subr.mxu0 0.0
    %265 = vmatpush1.xpose.msra.mxu0 0.0
    %266 = vmatprep.subr.mxu0 0.0
    %267 = vmatpush1.xpose.msra.mxu0 0.0
    %268 = vmatprep.subr.mxu0 0.0
    %269 = vmatpush1.xpose.msra.mxu0 0.0
    %270 = vmatprep.subr.mxu0 0.0
    %271 = vmatpush1.xpose.msra.mxu0 0.0
    %272 = vmatprep.subr.mxu0 0.0
    %273 = vmatpush1.xpose.msra.mxu0 0.0
    %274 = vmatprep.mubr.f32.mxu0 0.0
    %275 = vmatmul.mubr.f32.gmra.mrb[0].mxu0 %v206
    %v276 = vpop.f32.mrb[0].mxu0
    %v277 = vadd.f32 0.0, %v276
    %v278 = vpop.f32.mrb[0].mxu0
    %279 = vdwg.mxu0
    %281 = vrot.lane.b32.xlu0 %v200, 120
    %v282 = vpop.permute.xlu0 %281
    %v283 = vsel %vm121, %v200, 0
    %v285 = vsel %vm121, %v282, 0
    %287 = vmatprep.subr.mxu0 0.0
    %288 = vmatpush1.xpose.msra.mxu0 %v285
    %289 = vmatprep.subr.mxu0 0.0
    %290 = vmatpush1.xpose.msra.mxu0 0.0
    %291 = vmatprep.subr.mxu0 0.0
    %292 = vmatpush1.xpose.msra.mxu0 0.0
    %293 = vmatprep.subr.mxu0 0.0
    %294 = vmatpush1.xpose.msra.mxu0 0.0
    %295 = vmatprep.subr.mxu0 0.0
    %296 = vmatpush1.xpose.msra.mxu0 0.0
    %297 = vmatprep.subr.mxu0 0.0
    %298 = vmatpush1.xpose.msra.mxu0 0.0
    %299 = vmatprep.subr.mxu0 0.0
    %300 = vmatpush1.xpose.msra.mxu0 0.0
    %301 = vmatprep.subr.mxu0 0.0
    %302 = vmatpush1.xpose.msra.mxu0 0.0
    %303 = vmatprep.subr.mxu0 0.0
    %304 = vmatpush1.xpose.msra.mxu0 0.0
    %305 = vmatprep.subr.mxu0 0.0
    %306 = vmatpush1.xpose.msra.mxu0 0.0
    %307 = vmatprep.subr.mxu0 0.0
    %308 = vmatpush1.xpose.msra.mxu0 0.0
    %309 = vmatprep.subr.mxu0 0.0
    %310 = vmatpush1.xpose.msra.mxu0 0.0
    %311 = vmatprep.subr.mxu0 0.0
    %312 = vmatpush1.xpose.msra.mxu0 0.0
    %313 = vmatprep.subr.mxu0 0.0
    %314 = vmatpush1.xpose.msra.mxu0 0.0
    %315 = vmatprep.subr.mxu0 0.0
    %316 = vmatpush1.xpose.msra.mxu0 0.0
    %317 = vmatprep.subr.mxu0 0.0
    %318 = vmatpush1.xpose.msra.mxu0 0.0
    %319 = vmatprep.subr.mxu0 0.0
    %320 = vmatpush1.xpose.msra.mxu0 0.0
    %321 = vmatprep.subr.mxu0 0.0
    %322 = vmatpush1.xpose.msra.mxu0 0.0
    %323 = vmatprep.subr.mxu0 0.0
    %324 = vmatpush1.xpose.msra.mxu0 0.0
    %325 = vmatprep.subr.mxu0 0.0
    %326 = vmatpush1.xpose.msra.mxu0 0.0
    %327 = vmatprep.subr.mxu0 0.0
    %328 = vmatpush1.xpose.msra.mxu0 0.0
    %329 = vmatprep.subr.mxu0 0.0
    %330 = vmatpush1.xpose.msra.mxu0 0.0
    %331 = vmatprep.subr.mxu0 0.0
    %332 = vmatpush1.xpose.msra.mxu0 0.0
    %333 = vmatprep.subr.mxu0 0.0
    %334 = vmatpush1.xpose.msra.mxu0 0.0
    %335 = vmatprep.subr.mxu0 0.0
    %336 = vmatpush1.xpose.msra.mxu0 0.0
    %337 = vmatprep.subr.mxu0 0.0
    %338 = vmatpush1.xpose.msra.mxu0 0.0
    %339 = vmatprep.subr.mxu0 0.0
    %340 = vmatpush1.xpose.msra.mxu0 0.0
    %341 = vmatprep.subr.mxu0 0.0
    %342 = vmatpush1.xpose.msra.mxu0 0.0
    %343 = vmatprep.subr.mxu0 0.0
    %344 = vmatpush1.xpose.msra.mxu0 0.0
    %345 = vmatprep.subr.mxu0 0.0
    %346 = vmatpush1.xpose.msra.mxu0 0.0
    %347 = vmatprep.subr.mxu0 0.0
    %348 = vmatpush1.xpose.msra.mxu0 0.0
    %349 = vmatprep.subr.mxu0 0.0
    %350 = vmatpush1.xpose.msra.mxu0 0.0
    %351 = vmatprep.mubr.f32.mxu0 0.0
    %352 = vmatmul.mubr.f32.gmra.mrb[0].mxu0 %v283
    %v353 = vpop.f32.mrb[0].mxu0
    %v354 = vadd.f32 0.0, %v353
    %v355 = vpop.f32.mrb[0].mxu0
    %356 = vdwg.mxu0
    %v357 = vmul.f32 %v277, 0.35355338
    %v358 = vmul.f32 %v354, 0.35355338
    %v359 = vsel %vm104, %v357, -1e+09
    %v360 = vsel %vm105, %v358, -1e+09
    %v361 = vsel %vm121, %v359, -inf
    %362 = vmax.xlane.f32.xlu0 %v361
    %v363 = vpop.xlane.xlu0 %362
    %v364 = vsel %vm121, %v360, -inf
    %365 = vmax.xlane.f32.xlu0 %v364
    %v366 = vpop.xlane.xlu0 %365
    %v367 = vsub.f32 %v359, %v363
    %v368 = vsub.f32 %v360, %v366
    %v369 = vmul.f32 %v367, 1.442695
    %v370 = vpow.pop %v369
    %v371 = vmul.f32 %v368, 1.442695
    %v372 = vpow.pop %v371
    %v373 = vsel %vm121, %v370, 0.0
    %374 = vadd.xlane.f32.xlu0 %v373
    %v375 = vpop.xlane.xlu0 %374
    %v376 = vsel %vm121, %v372, 0.0
    %377 = vadd.xlane.f32.xlu0 %v376
    %v378 = vpop.xlane.xlu0 %377
    %v379 = vrcp.pop %v375
    %v380 = vrcp.pop %v378
    %v381 = vmul.f32 %v370, %v379
    %v382 = vmul.f32 %v372, %v380
    %383 = vrot.lane.b32.xlu0 %v195, 112
    %v384 = vpop.permute.xlu0 %383
    %v387 = vsel %vm121, %v381, 0
    %389 = vmatprep.subr.mxu0 0.0
    %390 = vmatpush1.msra.mxu0 %v384
    %391 = vmatprep.subr.mxu0 0.0
    %392 = vmatpush1.msra.mxu0 0.0
    %393 = vmatprep.subr.mxu0 0.0
    %394 = vmatpush1.msra.mxu0 0.0
    %395 = vmatprep.subr.mxu0 0.0
    %396 = vmatpush1.msra.mxu0 0.0
    %397 = vmatprep.subr.mxu0 0.0
    %398 = vmatpush1.msra.mxu0 0.0
    %399 = vmatprep.subr.mxu0 0.0
    %400 = vmatpush1.msra.mxu0 0.0
    %401 = vmatprep.subr.mxu0 0.0
    %402 = vmatpush1.msra.mxu0 0.0
    %403 = vmatprep.subr.mxu0 0.0
    %404 = vmatpush1.msra.mxu0 0.0
    %405 = vmatprep.subr.mxu0 0.0
    %406 = vmatpush1.msra.mxu0 0.0
    %407 = vmatprep.subr.mxu0 0.0
    %408 = vmatpush1.msra.mxu0 0.0
    %409 = vmatprep.subr.mxu0 0.0
    %410 = vmatpush1.msra.mxu0 0.0
    %411 = vmatprep.subr.mxu0 0.0
    %412 = vmatpush1.msra.mxu0 0.0
    %413 = vmatprep.subr.mxu0 0.0
    %414 = vmatpush1.msra.mxu0 0.0
    %415 = vmatprep.subr.mxu0 0.0
    %416 = vmatpush1.msra.mxu0 0.0
    %417 = vmatprep.subr.mxu0 0.0
    %418 = vmatpush1.msra.mxu0 0.0
    %419 = vmatprep.subr.mxu0 0.0
    %420 = vmatpush1.msra.mxu0 0.0
    %421 = vmatprep.subr.mxu0 0.0
    %422 = vmatpush1.msra.mxu0 0.0
    %423 = vmatprep.subr.mxu0 0.0
    %424 = vmatpush1.msra.mxu0 0.0
    %425 = vmatprep.subr.mxu0 0.0
    %426 = vmatpush1.msra.mxu0 0.0
    %427 = vmatprep.subr.mxu0 0.0
    %428 = vmatpush1.msra.mxu0 0.0
    %429 = vmatprep.subr.mxu0 0.0
    %430 = vmatpush1.msra.mxu0 0.0
    %431 = vmatprep.subr.mxu0 0.0
    %432 = vmatpush1.msra.mxu0 0.0
    %433 = vmatprep.subr.mxu0 0.0
    %434 = vmatpush1.msra.mxu0 0.0
    %435 = vmatprep.subr.mxu0 0.0
    %436 = vmatpush1.msra.mxu0 0.0
    %437 = vmatprep.subr.mxu0 0.0
    %438 = vmatpush1.msra.mxu0 0.0
    %439 = vmatprep.subr.mxu0 0.0
    %440 = vmatpush1.msra.mxu0 0.0
    %441 = vmatprep.subr.mxu0 0.0
    %442 = vmatpush1.msra.mxu0 0.0
    %443 = vmatprep.subr.mxu0 0.0
    %444 = vmatpush1.msra.mxu0 0.0
    %445 = vmatprep.subr.mxu0 0.0
    %446 = vmatpush1.msra.mxu0 0.0
    %447 = vmatprep.subr.mxu0 0.0
    %448 = vmatpush1.msra.mxu0 0.0
    %449 = vmatprep.subr.mxu0 0.0
    %450 = vmatpush1.msra.mxu0 0.0
    %451 = vmatprep.subr.mxu0 0.0
    %452 = vmatpush1.msra.mxu0 0.0
    %453 = vmatprep.mubr.f32.mxu0 0.0
    %454 = vmatmul.mubr.f32.gmra.mrb[0].mxu0 %v387
    %v455 = vpop.f32.mrb[0].mxu0
    %v456 = vadd.f32 0.0, %v455
    %v457 = vpop.f32.mrb[0].mxu0
    %458 = vdwg.mxu0
    %459 = vrot.lane.b32.xlu0 %v200, 112
    %v460 = vpop.permute.xlu0 %459
    %v463 = vsel %vm121, %v382, 0
    %465 = vmatprep.subr.mxu0 0.0
    %466 = vmatpush1.msra.mxu0 %v460
    %467 = vmatprep.subr.mxu0 0.0
    %468 = vmatpush1.msra.mxu0 0.0
    %469 = vmatprep.subr.mxu0 0.0
    %470 = vmatpush1.msra.mxu0 0.0
    %471 = vmatprep.subr.mxu0 0.0
    %472 = vmatpush1.msra.mxu0 0.0
    %473 = vmatprep.subr.mxu0 0.0
    %474 = vmatpush1.msra.mxu0 0.0
    %475 = vmatprep.subr.mxu0 0.0
    %476 = vmatpush1.msra.mxu0 0.0
    %477 = vmatprep.subr.mxu0 0.0
    %478 = vmatpush1.msra.mxu0 0.0
    %479 = vmatprep.subr.mxu0 0.0
    %480 = vmatpush1.msra.mxu0 0.0
    %481 = vmatprep.subr.mxu0 0.0
    %482 = vmatpush1.msra.mxu0 0.0
    %483 = vmatprep.subr.mxu0 0.0
    %484 = vmatpush1.msra.mxu0 0.0
    %485 = vmatprep.subr.mxu0 0.0
    %486 = vmatpush1.msra.mxu0 0.0
    %487 = vmatprep.subr.mxu0 0.0
    %488 = vmatpush1.msra.mxu0 0.0
    %489 = vmatprep.subr.mxu0 0.0
    %490 = vmatpush1.msra.mxu0 0.0
    %491 = vmatprep.subr.mxu0 0.0
    %492 = vmatpush1.msra.mxu0 0.0
    %493 = vmatprep.subr.mxu0 0.0
    %494 = vmatpush1.msra.mxu0 0.0
    %495 = vmatprep.subr.mxu0 0.0
    %496 = vmatpush1.msra.mxu0 0.0
    %497 = vmatprep.subr.mxu0 0.0
    %498 = vmatpush1.msra.mxu0 0.0
    %499 = vmatprep.subr.mxu0 0.0
    %500 = vmatpush1.msra.mxu0 0.0
    %501 = vmatprep.subr.mxu0 0.0
    %502 = vmatpush1.msra.mxu0 0.0
    %503 = vmatprep.subr.mxu0 0.0
    %504 = vmatpush1.msra.mxu0 0.0
    %505 = vmatprep.subr.mxu0 0.0
    %506 = vmatpush1.msra.mxu0 0.0
    %507 = vmatprep.subr.mxu0 0.0
    %508 = vmatpush1.msra.mxu0 0.0
    %509 = vmatprep.subr.mxu0 0.0
    %510 = vmatpush1.msra.mxu0 0.0
    %511 = vmatprep.subr.mxu0 0.0
    %512 = vmatpush1.msra.mxu0 0.0
    %513 = vmatprep.subr.mxu0 0.0
    %514 = vmatpush1.msra.mxu0 0.0
    %515 = vmatprep.subr.mxu0 0.0
    %516 = vmatpush1.msra.mxu0 0.0
    %517 = vmatprep.subr.mxu0 0.0
    %518 = vmatpush1.msra.mxu0 0.0
    %519 = vmatprep.subr.mxu0 0.0
    %520 = vmatpush1.msra.mxu0 0.0
    %521 = vmatprep.subr.mxu0 0.0
    %522 = vmatpush1.msra.mxu0 0.0
    %523 = vmatprep.subr.mxu0 0.0
    %524 = vmatpush1.msra.mxu0 0.0
    %525 = vmatprep.subr.mxu0 0.0
    %526 = vmatpush1.msra.mxu0 0.0
    %527 = vmatprep.subr.mxu0 0.0
    %528 = vmatpush1.msra.mxu0 0.0
    %529 = vmatprep.mubr.f32.mxu0 0.0
    %530 = vmatmul.mubr.f32.gmra.mrb[0].mxu0 %v463
    %v531 = vpop.f32.mrb[0].mxu0
    %v532 = vadd.f32 0.0, %v531
    %v533 = vpop.f32.mrb[0].mxu0
    %534 = vdwg.mxu0
    %v535 = vld [vmem:[%s5] sm:$0xff]
    %536 = vrot.lane.b32.xlu0 %v119, 104
    %v537 = vpop.permute.xlu0 %536
    %v540 = vsel %vm121, %v456, 0
    %v543 = vsel %vm121, %v532, 0
    %545 = vmatprep.subr.mxu0 0.0
    %546 = vmatpush1.msra.mxu0 %v535
    %547 = vmatprep.subr.mxu0 0.0
    %548 = vmatpush1.msra.mxu0 0.0
    %549 = vmatprep.subr.mxu0 0.0
    %550 = vmatpush1.msra.mxu0 0.0
    %551 = vmatprep.subr.mxu0 0.0
    %552 = vmatpush1.msra.mxu0 0.0
    %553 = vmatprep.subr.mxu0 0.0
    %554 = vmatpush1.msra.mxu0 0.0
    %555 = vmatprep.subr.mxu0 0.0
    %556 = vmatpush1.msra.mxu0 0.0
    %557 = vmatprep.subr.mxu0 0.0
    %558 = vmatpush1.msra.mxu0 0.0
    %559 = vmatprep.subr.mxu0 0.0
    %560 = vmatpush1.msra.mxu0 0.0
    %561 = vmatprep.subr.mxu0 0.0
    %562 = vmatpush1.msra.mxu0 0.0
    %563 = vmatprep.subr.mxu0 0.0
    %564 = vmatpush1.msra.mxu0 0.0
    %565 = vmatprep.subr.mxu0 0.0
    %566 = vmatpush1.msra.mxu0 0.0
    %567 = vmatprep.subr.mxu0 0.0
    %568 = vmatpush1.msra.mxu0 0.0
    %569 = vmatprep.subr.mxu0 0.0
    %570 = vmatpush1.msra.mxu0 0.0
    %571 = vmatprep.subr.mxu0 0.0
    %572 = vmatpush1.msra.mxu0 0.0
    %573 = vmatprep.subr.mxu0 0.0
    %574 = vmatpush1.msra.mxu0 0.0
    %575 = vmatprep.subr.mxu0 0.0
    %576 = vmatpush1.msra.mxu0 0.0
    %577 = vmatprep.subr.mxu0 0.0
    %578 = vmatpush1.msra.mxu0 0.0
    %579 = vmatprep.subr.mxu0 0.0
    %580 = vmatpush1.msra.mxu0 0.0
    %581 = vmatprep.subr.mxu0 0.0
    %582 = vmatpush1.msra.mxu0 0.0
    %583 = vmatprep.subr.mxu0 0.0
    %584 = vmatpush1.msra.mxu0 0.0
    %585 = vmatprep.subr.mxu0 0.0
    %586 = vmatpush1.msra.mxu0 0.0
    %587 = vmatprep.subr.mxu0 0.0
    %588 = vmatpush1.msra.mxu0 0.0
    %589 = vmatprep.subr.mxu0 0.0
    %590 = vmatpush1.msra.mxu0 0.0
    %591 = vmatprep.subr.mxu0 0.0
    %592 = vmatpush1.msra.mxu0 0.0
    %593 = vmatprep.subr.mxu0 0.0
    %594 = vmatpush1.msra.mxu0 0.0
    %595 = vmatprep.subr.mxu0 0.0
    %596 = vmatpush1.msra.mxu0 0.0
    %597 = vmatprep.subr.mxu0 0.0
    %598 = vmatpush1.msra.mxu0 0.0
    %599 = vmatprep.subr.mxu0 0.0
    %600 = vmatpush1.msra.mxu0 0.0
    %601 = vmatprep.subr.mxu0 0.0
    %602 = vmatpush1.msra.mxu0 0.0
    %603 = vmatprep.subr.mxu0 0.0
    %604 = vmatpush1.msra.mxu0 0.0
    %605 = vmatprep.subr.mxu0 0.0
    %606 = vmatpush1.msra.mxu0 0.0
    %607 = vmatprep.subr.mxu0 0.0
    %608 = vmatpush1.msra.mxu0 0.0
    %609 = vmatprep.mubr.f32.mxu0 0.0
    %610 = vmatmul.mubr.f32.gmra.mrb[0].mxu0 %v540
    %v611 = vpop.f32.mrb[0].mxu0
    %v612 = vadd.f32 %v537, %v611
    %v613 = vpop.f32.mrb[0].mxu0
    %614 = vmatprep.mubr.f32.mxu0 0.0
    %615 = vmatmul.mubr.f32.gmra.mrb[0].mxu0 %v543
    %v616 = vpop.f32.mrb[0].mxu0
    %v617 = vadd.f32 %v537, %v616
    %v618 = vpop.f32.mrb[0].mxu0
    %619 = vdwg.mxu0
    %v620 = vadd.f32 %v96, %v612
    %v621 = vadd.f32 %v97, %v617
    %v622 = vsel %vm121, %v620, 0.0
    %623 = vadd.xlane.f32.xlu0 %v622
    %v624 = vpop.xlane.xlu0 %623
    %v625 = vsel %vm121, %v621, 0.0
    %626 = vadd.xlane.f32.xlu0 %v625
    %v627 = vpop.xlane.xlu0 %626
    %v628 = vrcp.pop 8.0
    %v629 = vmul.f32 %v624, %v628
    %v630 = vmul.f32 %v627, %v628
    %v631 = vsub.f32 %v620, %v629
    %v632 = vsub.f32 %v621, %v630
    %v633 = vmul.f32 %v631, %v631
    %v634 = vmul.f32 %v632, %v632
    %v635 = vsel %vm121, %v633, 0.0
    %636 = vadd.xlane.f32.xlu0 %v635
    %v637 = vpop.xlane.xlu0 %636
    %v638 = vsel %vm121, %v634, 0.0
    %639 = vadd.xlane.f32.xlu0 %v638
    %v640 = vpop.xlane.xlu0 %639
    %v641 = vmul.f32 %v637, %v628
    %v642 = vmul.f32 %v640, %v628
    %v643 = vadd.f32 %v641, 1e-05
    %v644 = vadd.f32 %v642, 1e-05
    %v645 = vrsqrt.pop %v643
    %v646 = vrsqrt.pop %v644
    %v647 = vmul.f32 %v631, %v645
    %v648 = vmul.f32 %v632, %v646
    %v649 = vlaneseq
    %v650 = vshrl.u32 %v649, 7
    %v651 = vsub.s32 0, %v650
    %v652 = vrot.slane %v113, %v651
    %v653 = vmul.f32 %v647, %v652
    %v654 = vmul.f32 %v648, %v652
    %v655 = vlaneseq
    %v656 = vshrl.u32 %v655, 7
    %v657 = vsub.s32 1, %v656
    %v658 = vrot.slane %v113, %v657
    %v659 = vadd.f32 %v653, %v658
    %v660 = vadd.f32 %v654, %v658
    %v661 = vld [vmem:[#allocation7] sm:$0xff]
    %662 = vrot.lane.b32.xlu0 %v119, 96
    %v663 = vpop.permute.xlu0 %662
    %v666 = vsel %vm121, %v659, 0
    %v669 = vsel %vm121, %v660, 0
    %671 = vmatprep.subr.mxu0 0.0
    %672 = vmatpush1.msra.mxu0 %v661
    %673 = vmatprep.subr.mxu0 0.0
    %674 = vmatpush1.msra.mxu0 0.0
    %675 = vmatprep.subr.mxu0 0.0
    %676 = vmatpush1.msra.mxu0 0.0
    %677 = vmatprep.subr.mxu0 0.0
    %678 = vmatpush1.msra.mxu0 0.0
    %679 = vmatprep.subr.mxu0 0.0
    %680 = vmatpush1.msra.mxu0 0.0
    %681 = vmatprep.subr.mxu0 0.0
    %682 = vmatpush1.msra.mxu0 0.0
    %683 = vmatprep.subr.mxu0 0.0
    %684 = vmatpush1.msra.mxu0 0.0
    %685 = vmatprep.subr.mxu0 0.0
    %686 = vmatpush1.msra.mxu0 0.0
    %687 = vmatprep.subr.mxu0 0.0
    %688 = vmatpush1.msra.mxu0 0.0
    %689 = vmatprep.subr.mxu0 0.0
    %690 = vmatpush1.msra.mxu0 0.0
    %691 = vmatprep.subr.mxu0 0.0
    %692 = vmatpush1.msra.mxu0 0.0
    %693 = vmatprep.subr.mxu0 0.0
    %694 = vmatpush1.msra.mxu0 0.0
    %695 = vmatprep.subr.mxu0 0.0
    %696 = vmatpush1.msra.mxu0 0.0
    %697 = vmatprep.subr.mxu0 0.0
    %698 = vmatpush1.msra.mxu0 0.0
    %699 = vmatprep.subr.mxu0 0.0
    %700 = vmatpush1.msra.mxu0 0.0
    %701 = vmatprep.subr.mxu0 0.0
    %702 = vmatpush1.msra.mxu0 0.0
    %703 = vmatprep.subr.mxu0 0.0
    %704 = vmatpush1.msra.mxu0 0.0
    %705 = vmatprep.subr.mxu0 0.0
    %706 = vmatpush1.msra.mxu0 0.0
    %707 = vmatprep.subr.mxu0 0.0
    %708 = vmatpush1.msra.mxu0 0.0
    %709 = vmatprep.subr.mxu0 0.0
    %710 = vmatpush1.msra.mxu0 0.0
    %711 = vmatprep.subr.mxu0 0.0
    %712 = vmatpush1.msra.mxu0 0.0
    %713 = vmatprep.subr.mxu0 0.0
    %714 = vmatpush1.msra.mxu0 0.0
    %715 = vmatprep.subr.mxu0 0.0
    %716 = vmatpush1.msra.mxu0 0.0
    %717 = vmatprep.subr.mxu0 0.0
    %718 = vmatpush1.msra.mxu0 0.0
    %719 = vmatprep.subr.mxu0 0.0
    %720 = vmatpush1.msra.mxu0 0.0
    %721 = vmatprep.subr.mxu0 0.0
    %722 = vmatpush1.msra.mxu0 0.0
    %723 = vmatprep.subr.mxu0 0.0
    %724 = vmatpush1.msra.mxu0 0.0
    %725 = vmatprep.subr.mxu0 0.0
    %726 = vmatpush1.msra.mxu0 0.0
    %727 = vmatprep.subr.mxu0 0.0
    %728 = vmatpush1.msra.mxu0 0.0
    %729 = vmatprep.subr.mxu0 0.0
    %730 = vmatpush1.msra.mxu0 0.0
    %731 = vmatprep.subr.mxu0 0.0
    %732 = vmatpush1.msra.mxu0 0.0
    %733 = vmatprep.subr.mxu0 0.0
    %734 = vmatpush1.msra.mxu0 0.0
    %735 = vmatprep.mubr.f32.mxu0 0.0
    %736 = vmatmul.mubr.f32.gmra.mrb[0].mxu0 %v666
    %v737 = vpop.f32.mrb[0].mxu0
    %v738 = vadd.f32 %v663, %v737
    %v739 = vpop.f32.mrb[0].mxu0
    %740 = vmatprep.mubr.f32.mxu0 0.0
    %741 = vmatmul.mubr.f32.gmra.mrb[0].mxu0 %v669
    %v742 = vpop.f32.mrb[0].mxu0
    %v743 = vadd.f32 %v663, %v742
    %v744 = vpop.f32.mrb[0].mxu0
    %745 = vdwg.mxu0
    %v746 = vld [vmem:[%s7] sm:$0xff]
    %747 = vrot.lane.b32.xlu0 %v119, 88
    %v748 = vpop.permute.xlu0 %747
    %v751 = vsel %vm121, %v98, 0
    %v754 = vsel %vm121, %v99, 0
    %756 = vmatprep.subr.mxu0 0.0
    %757 = vmatpush1.msra.mxu0 %v746
    %758 = vmatprep.subr.mxu0 0.0
    %759 = vmatpush1.msra.mxu0 0.0
    %760 = vmatprep.subr.mxu0 0.0
    %761 = vmatpush1.msra.mxu0 0.0
    %762 = vmatprep.subr.mxu0 0.0
    %763 = vmatpush1.msra.mxu0 0.0
    %764 = vmatprep.subr.mxu0 0.0
    %765 = vmatpush1.msra.mxu0 0.0
    %766 = vmatprep.subr.mxu0 0.0
    %767 = vmatpush1.msra.mxu0 0.0
    %768 = vmatprep.subr.mxu0 0.0
    %769 = vmatpush1.msra.mxu0 0.0
    %770 = vmatprep.subr.mxu0 0.0
    %771 = vmatpush1.msra.mxu0 0.0
    %772 = vmatprep.subr.mxu0 0.0
    %773 = vmatpush1.msra.mxu0 0.0
    %774 = vmatprep.subr.mxu0 0.0
    %775 = vmatpush1.msra.mxu0 0.0
    %776 = vmatprep.subr.mxu0 0.0
    %777 = vmatpush1.msra.mxu0 0.0
    %778 = vmatprep.subr.mxu0 0.0
    %779 = vmatpush1.msra.mxu0 0.0
    %780 = vmatprep.subr.mxu0 0.0
    %781 = vmatpush1.msra.mxu0 0.0
    %782 = vmatprep.subr.mxu0 0.0
    %783 = vmatpush1.msra.mxu0 0.0
    %784 = vmatprep.subr.mxu0 0.0
    %785 = vmatpush1.msra.mxu0 0.0
    %786 = vmatprep.subr.mxu0 0.0
    %787 = vmatpush1.msra.mxu0 0.0
    %788 = vmatprep.subr.mxu0 0.0
    %789 = vmatpush1.msra.mxu0 0.0
    %790 = vmatprep.subr.mxu0 0.0
    %791 = vmatpush1.msra.mxu0 0.0
    %792 = vmatprep.subr.mxu0 0.0
    %793 = vmatpush1.msra.mxu0 0.0
    %794 = vmatprep.subr.mxu0 0.0
    %795 = vmatpush1.msra.mxu0 0.0
    %796 = vmatprep.subr.mxu0 0.0
    %797 = vmatpush1.msra.mxu0 0.0
    %798 = vmatprep.subr.mxu0 0.0
    %799 = vmatpush1.msra.mxu0 0.0
    %800 = vmatprep.subr.mxu0 0.0
    %801 = vmatpush1.msra.mxu0 0.0
    %802 = vmatprep.subr.mxu0 0.0
    %803 = vmatpush1.msra.mxu0 0.0
    %804 = vmatprep.subr.mxu0 0.0
    %805 = vmatpush1.msra.mxu0 0.0
    %806 = vmatprep.subr.mxu0 0.0
    %807 = vmatpush1.msra.mxu0 0.0
    %808 = vmatprep.subr.mxu0 0.0
    %809 = vmatpush1.msra.mxu0 0.0
    %810 = vmatprep.subr.mxu0 0.0
    %811 = vmatpush1.msra.mxu0 0.0
    %812 = vmatprep.subr.mxu0 0.0
    %813 = vmatpush1.msra.mxu0 0.0
    %814 = vmatprep.subr.mxu0 0.0
    %815 = vmatpush1.msra.mxu0 0.0
    %816 = vmatprep.subr.mxu0 0.0
    %817 = vmatpush1.msra.mxu0 0.0
    %818 = vmatprep.subr.mxu0 0.0
    %819 = vmatpush1.msra.mxu0 0.0
    %820 = vmatprep.mubr.f32.mxu0 0.0
    %821 = vmatmul.mubr.f32.gmra.mrb[0].mxu0 %v751
    %v822 = vpop.f32.mrb[0].mxu0
    %v823 = vadd.f32 %v748, %v822
    %v824 = vpop.f32.mrb[0].mxu0
    %825 = vmatprep.mubr.f32.mxu0 0.0
    %826 = vmatmul.mubr.f32.gmra.mrb[0].mxu0 %v754
    %v827 = vpop.f32.mrb[0].mxu0
    %v828 = vadd.f32 %v748, %v827
    %v829 = vpop.f32.mrb[0].mxu0
    %830 = vdwg.mxu0
    %v832 = vsel %vm121, %v738, 0
    %v835 = vsel %vm121, %v823, 0
    %837 = vmatprep.subr.mxu0 0.0
    %838 = vmatpush1.xpose.msra.mxu0 %v835
    %839 = vmatprep.subr.mxu0 0.0
    %840 = vmatpush1.xpose.msra.mxu0 0.0
    %841 = vmatprep.subr.mxu0 0.0
    %842 = vmatpush1.xpose.msra.mxu0 0.0
    %843 = vmatprep.subr.mxu0 0.0
    %844 = vmatpush1.xpose.msra.mxu0 0.0
    %845 = vmatprep.subr.mxu0 0.0
    %846 = vmatpush1.xpose.msra.mxu0 0.0
    %847 = vmatprep.subr.mxu0 0.0
    %848 = vmatpush1.xpose.msra.mxu0 0.0
    %849 = vmatprep.subr.mxu0 0.0
    %850 = vmatpush1.xpose.msra.mxu0 0.0
    %851 = vmatprep.subr.mxu0 0.0
    %852 = vmatpush1.xpose.msra.mxu0 0.0
    %853 = vmatprep.subr.mxu0 0.0
    %854 = vmatpush1.xpose.msra.mxu0 0.0
    %855 = vmatprep.subr.mxu0 0.0
    %856 = vmatpush1.xpose.msra.mxu0 0.0
    %857 = vmatprep.subr.mxu0 0.0
    %858 = vmatpush1.xpose.msra.mxu0 0.0
    %859 = vmatprep.subr.mxu0 0.0
    %860 = vmatpush1.xpose.msra.mxu0 0.0
    %861 = vmatprep.subr.mxu0 0.0
    %862 = vmatpush1.xpose.msra.mxu0 0.0
    %863 = vmatprep.subr.mxu0 0.0
    %864 = vmatpush1.xpose.msra.mxu0 0.0
    %865 = vmatprep.subr.mxu0 0.0
    %866 = vmatpush1.xpose.msra.mxu0 0.0
    %867 = vmatprep.subr.mxu0 0.0
    %868 = vmatpush1.xpose.msra.mxu0 0.0
    %869 = vmatprep.subr.mxu0 0.0
    %870 = vmatpush1.xpose.msra.mxu0 0.0
    %871 = vmatprep.subr.mxu0 0.0
    %872 = vmatpush1.xpose.msra.mxu0 0.0
    %873 = vmatprep.subr.mxu0 0.0
    %874 = vmatpush1.xpose.msra.mxu0 0.0
    %875 = vmatprep.subr.mxu0 0.0
    %876 = vmatpush1.xpose.msra.mxu0 0.0
    %877 = vmatprep.subr.mxu0 0.0
    %878 = vmatpush1.xpose.msra.mxu0 0.0
    %879 = vmatprep.subr.mxu0 0.0
    %880 = vmatpush1.xpose.msra.mxu0 0.0
    %881 = vmatprep.subr.mxu0 0.0
    %882 = vmatpush1.xpose.msra.mxu0 0.0
    %883 = vmatprep.subr.mxu0 0.0
    %884 = vmatpush1.xpose.msra.mxu0 0.0
    %885 = vmatprep.subr.mxu0 0.0
    %886 = vmatpush1.xpose.msra.mxu0 0.0
    %887 = vmatprep.subr.mxu0 0.0
    %888 = vmatpush1.xpose.msra.mxu0 0.0
    %889 = vmatprep.subr.mxu0 0.0
    %890 = vmatpush1.xpose.msra.mxu0 0.0
    %891 = vmatprep.subr.mxu0 0.0
    %892 = vmatpush1.xpose.msra.mxu0 0.0
    %893 = vmatprep.subr.mxu0 0.0
    %894 = vmatpush1.xpose.msra.mxu0 0.0
    %895 = vmatprep.subr.mxu0 0.0
    %896 = vmatpush1.xpose.msra.mxu0 0.0
    %897 = vmatprep.subr.mxu0 0.0
    %898 = vmatpush1.xpose.msra.mxu0 0.0
    %899 = vmatprep.subr.mxu0 0.0
    %900 = vmatpush1.xpose.msra.mxu0 0.0
    %901 = vmatprep.mubr.f32.mxu0 0.0
    %902 = vmatmul.mubr.f32.gmra.mrb[0].mxu0 %v832
    %v903 = vpop.f32.mrb[0].mxu0
    %v904 = vadd.f32 0.0, %v903
    %v905 = vpop.f32.mrb[0].mxu0
    %906 = vdwg.mxu0
    %v908 = vsel %vm121, %v743, 0
    %v911 = vsel %vm121, %v828, 0
    %913 = vmatprep.subr.mxu0 0.0
    %914 = vmatpush1.xpose.msra.mxu0 %v911
    %915 = vmatprep.subr.mxu0 0.0
    %916 = vmatpush1.xpose.msra.mxu0 0.0
    %917 = vmatprep.subr.mxu0 0.0
    %918 = vmatpush1.xpose.msra.mxu0 0.0
    %919 = vmatprep.subr.mxu0 0.0
    %920 = vmatpush1.xpose.msra.mxu0 0.0
    %921 = vmatprep.subr.mxu0 0.0
    %922 = vmatpush1.xpose.msra.mxu0 0.0
    %923 = vmatprep.subr.mxu0 0.0
    %924 = vmatpush1.xpose.msra.mxu0 0.0
    %925 = vmatprep.subr.mxu0 0.0
    %926 = vmatpush1.xpose.msra.mxu0 0.0
    %927 = vmatprep.subr.mxu0 0.0
    %928 = vmatpush1.xpose.msra.mxu0 0.0
    %929 = vmatprep.subr.mxu0 0.0
    %930 = vmatpush1.xpose.msra.mxu0 0.0
    %931 = vmatprep.subr.mxu0 0.0
    %932 = vmatpush1.xpose.msra.mxu0 0.0
    %933 = vmatprep.subr.mxu0 0.0
    %934 = vmatpush1.xpose.msra.mxu0 0.0
    %935 = vmatprep.subr.mxu0 0.0
    %936 = vmatpush1.xpose.msra.mxu0 0.0
    %937 = vmatprep.subr.mxu0 0.0
    %938 = vmatpush1.xpose.msra.mxu0 0.0
    %939 = vmatprep.subr.mxu0 0.0
    %940 = vmatpush1.xpose.msra.mxu0 0.0
    %941 = vmatprep.subr.mxu0 0.0
    %942 = vmatpush1.xpose.msra.mxu0 0.0
    %943 = vmatprep.subr.mxu0 0.0
    %944 = vmatpush1.xpose.msra.mxu0 0.0
    %945 = vmatprep.subr.mxu0 0.0
    %946 = vmatpush1.xpose.msra.mxu0 0.0
    %947 = vmatprep.subr.mxu0 0.0
    %948 = vmatpush1.xpose.msra.mxu0 0.0
    %949 = vmatprep.subr.mxu0 0.0
    %950 = vmatpush1.xpose.msra.mxu0 0.0
    %951 = vmatprep.subr.mxu0 0.0
    %952 = vmatpush1.xpose.msra.mxu0 0.0
    %953 = vmatprep.subr.mxu0 0.0
    %954 = vmatpush1.xpose.msra.mxu0 0.0
    %955 = vmatprep.subr.mxu0 0.0
    %956 = vmatpush1.xpose.msra.mxu0 0.0
    %957 = vmatprep.subr.mxu0 0.0
    %958 = vmatpush1.xpose.msra.mxu0 0.0
    %959 = vmatprep.subr.mxu0 0.0
    %960 = vmatpush1.xpose.msra.mxu0 0.0
    %961 = vmatprep.subr.mxu0 0.0
    %962 = vmatpush1.xpose.msra.mxu0 0.0
    %963 = vmatprep.subr.mxu0 0.0
    %964 = vmatpush1.xpose.msra.mxu0 0.0
    %965 = vmatprep.subr.mxu0 0.0
    %966 = vmatpush1.xpose.msra.mxu0 0.0
    %967 = vmatprep.subr.mxu0 0.0
    %968 = vmatpush1.xpose.msra.mxu0 0.0
    %969 = vmatprep.subr.mxu0 0.0
    %970 = vmatpush1.xpose.msra.mxu0 0.0
    %971 = vmatprep.subr.mxu0 0.0
    %972 = vmatpush1.xpose.msra.mxu0 0.0
    %973 = vmatprep.subr.mxu0 0.0
    %974 = vmatpush1.xpose.msra.mxu0 0.0
    %975 = vmatprep.subr.mxu0 0.0
    %976 = vmatpush1.xpose.msra.mxu0 0.0
    %977 = vmatprep.mubr.f32.mxu0 0.0
    %978 = vmatmul.mubr.f32.gmra.mrb[0].mxu0 %v908
    %v979 = vpop.f32.mrb[0].mxu0
    %v980 = vadd.f32 0.0, %v979
    %v981 = vpop.f32.mrb[0].mxu0
    %982 = vdwg.mxu0
    %v983 = vmul.f32 %v904, 0.35355338
    %v984 = vmul.f32 %v980, 0.35355338
    %v985 = vsel %vm110, %v983, -1e+09
    %v986 = vsel %vm111, %v984, -1e+09
    %v987 = vsel %vm121, %v985, -inf
    %988 = vmax.xlane.f32.xlu0 %v987
    %v989 = vpop.xlane.xlu0 %988
    %v990 = vsel %vm121, %v986, -inf
    %991 = vmax.xlane.f32.xlu0 %v990
    %v992 = vpop.xlane.xlu0 %991
    %v993 = vsub.f32 %v985, %v989
    %v994 = vsub.f32 %v986, %v992
    %v995 = vmul.f32 %v993, 1.442695
    %v996 = vpow.pop %v995
    %v997 = vmul.f32 %v994, 1.442695
    %v998 = vpow.pop %v997
    %v999 = vsel %vm121, %v996, 0.0
    %1000 = vadd.xlane.f32.xlu0 %v999
    %v1001 = vpop.xlane.xlu0 %1000
    %v1002 = vsel %vm121, %v998, 0.0
    %1003 = vadd.xlane.f32.xlu0 %v1002
    %v1004 = vpop.xlane.xlu0 %1003
    %v1005 = vrcp.pop %v1001
    %v1006 = vrcp.pop %v1004
    %v1007 = vmul.f32 %v996, %v1005
    %v1008 = vmul.f32 %v998, %v1006
    %1009 = vrot.lane.b32.xlu0 %v823, 120
    %v1010 = vpop.permute.xlu0 %1009
    %v1013 = vsel %vm121, %v1007, 0
    %1015 = vmatprep.subr.mxu0 0.0
    %1016 = vmatpush1.msra.mxu0 %v1010
    %1017 = vmatprep.subr.mxu0 0.0
    %1018 = vmatpush1.msra.mxu0 0.0
    %1019 = vmatprep.subr.mxu0 0.0
    %1020 = vmatpush1.msra.mxu0 0.0
    %1021 = vmatprep.subr.mxu0 0.0
    %1022 = vmatpush1.msra.mxu0 0.0
    %1023 = vmatprep.subr.mxu0 0.0
    %1024 = vmatpush1.msra.mxu0 0.0
    %1025 = vmatprep.subr.mxu0 0.0
    %1026 = vmatpush1.msra.mxu0 0.0
    %1027 = vmatprep.subr.mxu0 0.0
    %1028 = vmatpush1.msra.mxu0 0.0
    %1029 = vmatprep.subr.mxu0 0.0
    %1030 = vmatpush1.msra.mxu0 0.0
    %1031 = vmatprep.subr.mxu0 0.0
    %1032 = vmatpush1.msra.mxu0 0.0
    %1033 = vmatprep.subr.mxu0 0.0
    %1034 = vmatpush1.msra.mxu0 0.0
    %1035 = vmatprep.subr.mxu0 0.0
    %1036 = vmatpush1.msra.mxu0 0.0
    %1037 = vmatprep.subr.mxu0 0.0
    %1038 = vmatpush1.msra.mxu0 0.0
    %1039 = vmatprep.subr.mxu0 0.0
    %1040 = vmatpush1.msra.mxu0 0.0
    %1041 = vmatprep.subr.mxu0 0.0
    %1042 = vmatpush1.msra.mxu0 0.0
    %1043 = vmatprep.subr.mxu0 0.0
    %1044 = vmatpush1.msra.mxu0 0.0
    %1045 = vmatprep.subr.mxu0 0.0
    %1046 = vmatpush1.msra.mxu0 0.0
    %1047 = vmatprep.subr.mxu0 0.0
    %1048 = vmatpush1.msra.mxu0 0.0
    %1049 = vmatprep.subr.mxu0 0.0
    %1050 = vmatpush1.msra.mxu0 0.0
    %1051 = vmatprep.subr.mxu0 0.0
    %1052 = vmatpush1.msra.mxu0 0.0
    %1053 = vmatprep.subr.mxu0 0.0
    %1054 = vmatpush1.msra.mxu0 0.0
    %1055 = vmatprep.subr.mxu0 0.0
    %1056 = vmatpush1.msra.mxu0 0.0
    %1057 = vmatprep.subr.mxu0 0.0
    %1058 = vmatpush1.msra.mxu0 0.0
    %1059 = vmatprep.subr.mxu0 0.0
    %1060 = vmatpush1.msra.mxu0 0.0
    %1061 = vmatprep.subr.mxu0 0.0
    %1062 = vmatpush1.msra.mxu0 0.0
    %1063 = vmatprep.subr.mxu0 0.0
    %1064 = vmatpush1.msra.mxu0 0.0
    %1065 = vmatprep.subr.mxu0 0.0
    %1066 = vmatpush1.msra.mxu0 0.0
    %1067 = vmatprep.subr.mxu0 0.0
    %1068 = vmatpush1.msra.mxu0 0.0
    %1069 = vmatprep.subr.mxu0 0.0
    %1070 = vmatpush1.msra.mxu0 0.0
    %1071 = vmatprep.subr.mxu0 0.0
    %1072 = vmatpush1.msra.mxu0 0.0
    %1073 = vmatprep.subr.mxu0 0.0
    %1074 = vmatpush1.msra.mxu0 0.0
    %1075 = vmatprep.subr.mxu0 0.0
    %1076 = vmatpush1.msra.mxu0 0.0
    %1077 = vmatprep.subr.mxu0 0.0
    %1078 = vmatpush1.msra.mxu0 0.0
    %1079 = vmatprep.mubr.f32.mxu0 0.0
    %1080 = vmatmul.mubr.f32.gmra.mrb[0].mxu0 %v1013
    %v1081 = vpop.f32.mrb[0].mxu0
    %v1082 = vadd.f32 0.0, %v1081
    %v1083 = vpop.f32.mrb[0].mxu0
    %1084 = vdwg.mxu0
    %1085 = vrot.lane.b32.xlu0 %v828, 120
    %v1086 = vpop.permute.xlu0 %1085
    %v1089 = vsel %vm121, %v1008, 0
    %1091 = vmatprep.subr.mxu0 0.0
    %1092 = vmatpush1.msra.mxu0 %v1086
    %1093 = vmatprep.subr.mxu0 0.0
    %1094 = vmatpush1.msra.mxu0 0.0
    %1095 = vmatprep.subr.mxu0 0.0
    %1096 = vmatpush1.msra.mxu0 0.0
    %1097 = vmatprep.subr.mxu0 0.0
    %1098 = vmatpush1.msra.mxu0 0.0
    %1099 = vmatprep.subr.mxu0 0.0
    %1100 = vmatpush1.msra.mxu0 0.0
    %1101 = vmatprep.subr.mxu0 0.0
    %1102 = vmatpush1.msra.mxu0 0.0
    %1103 = vmatprep.subr.mxu0 0.0
    %1104 = vmatpush1.msra.mxu0 0.0
    %1105 = vmatprep.subr.mxu0 0.0
    %1106 = vmatpush1.msra.mxu0 0.0
    %1107 = vmatprep.subr.mxu0 0.0
    %1108 = vmatpush1.msra.mxu0 0.0
    %1109 = vmatprep.subr.mxu0 0.0
    %1110 = vmatpush1.msra.mxu0 0.0
    %1111 = vmatprep.subr.mxu0 0.0
    %1112 = vmatpush1.msra.mxu0 0.0
    %1113 = vmatprep.subr.mxu0 0.0
    %1114 = vmatpush1.msra.mxu0 0.0
    %1115 = vmatprep.subr.mxu0 0.0
    %1116 = vmatpush1.msra.mxu0 0.0
    %1117 = vmatprep.subr.mxu0 0.0
    %1118 = vmatpush1.msra.mxu0 0.0
    %1119 = vmatprep.subr.mxu0 0.0
    %1120 = vmatpush1.msra.mxu0 0.0
    %1121 = vmatprep.subr.mxu0 0.0
    %1122 = vmatpush1.msra.mxu0 0.0
    %1123 = vmatprep.subr.mxu0 0.0
    %1124 = vmatpush1.msra.mxu0 0.0
    %1125 = vmatprep.subr.mxu0 0.0
    %1126 = vmatpush1.msra.mxu0 0.0
    %1127 = vmatprep.subr.mxu0 0.0
    %1128 = vmatpush1.msra.mxu0 0.0
    %1129 = vmatprep.subr.mxu0 0.0
    %1130 = vmatpush1.msra.mxu0 0.0
    %1131 = vmatprep.subr.mxu0 0.0
    %1132 = vmatpush1.msra.mxu0 0.0
    %1133 = vmatprep.subr.mxu0 0.0
    %1134 = vmatpush1.msra.mxu0 0.0
    %1135 = vmatprep.subr.mxu0 0.0
    %1136 = vmatpush1.msra.mxu0 0.0
    %1137 = vmatprep.subr.mxu0 0.0
    %1138 = vmatpush1.msra.mxu0 0.0
    %1139 = vmatprep.subr.mxu0 0.0
    %1140 = vmatpush1.msra.mxu0 0.0
    %1141 = vmatprep.subr.mxu0 0.0
    %1142 = vmatpush1.msra.mxu0 0.0
    %1143 = vmatprep.subr.mxu0 0.0
    %1144 = vmatpush1.msra.mxu0 0.0
    %1145 = vmatprep.subr.mxu0 0.0
    %1146 = vmatpush1.msra.mxu0 0.0
    %1147 = vmatprep.subr.mxu0 0.0
    %1148 = vmatpush1.msra.mxu0 0.0
    %1149 = vmatprep.subr.mxu0 0.0
    %1150 = vmatpush1.msra.mxu0 0.0
    %1151 = vmatprep.subr.mxu0 0.0
    %1152 = vmatpush1.msra.mxu0 0.0
    %1153 = vmatprep.subr.mxu0 0.0
    %1154 = vmatpush1.msra.mxu0 0.0
    %1155 = vmatprep.mubr.f32.mxu0 0.0
    %1156 = vmatmul.mubr.f32.gmra.mrb[0].mxu0 %v1089
    %v1157 = vpop.f32.mrb[0].mxu0
    %v1158 = vadd.f32 0.0, %v1157
    %v1159 = vpop.f32.mrb[0].mxu0
    %1160 = vdwg.mxu0
    %v1161 = vld [vmem:[#allocation8] sm:$0xff]
    %1162 = vrot.lane.b32.xlu0 %v119, 72
    %v1163 = vpop.permute.xlu0 %1162
    %v1166 = vsel %vm121, %v1082, 0
    %v1169 = vsel %vm121, %v1158, 0
    %1171 = vmatprep.subr.mxu0 0.0
    %1172 = vmatpush1.msra.mxu0 %v1161
    %1173 = vmatprep.subr.mxu0 0.0
    %1174 = vmatpush1.msra.mxu0 0.0
    %1175 = vmatprep.subr.mxu0 0.0
    %1176 = vmatpush1.msra.mxu0 0.0
    %1177 = vmatprep.subr.mxu0 0.0
    %1178 = vmatpush1.msra.mxu0 0.0
    %1179 = vmatprep.subr.mxu0 0.0
    %1180 = vmatpush1.msra.mxu0 0.0
    %1181 = vmatprep.subr.mxu0 0.0
    %1182 = vmatpush1.msra.mxu0 0.0
    %1183 = vmatprep.subr.mxu0 0.0
    %1184 = vmatpush1.msra.mxu0 0.0
    %1185 = vmatprep.subr.mxu0 0.0
    %1186 = vmatpush1.msra.mxu0 0.0
    %1187 = vmatprep.subr.mxu0 0.0
    %1188 = vmatpush1.msra.mxu0 0.0
    %1189 = vmatprep.subr.mxu0 0.0
    %1190 = vmatpush1.msra.mxu0 0.0
    %1191 = vmatprep.subr.mxu0 0.0
    %1192 = vmatpush1.msra.mxu0 0.0
    %1193 = vmatprep.subr.mxu0 0.0
    %1194 = vmatpush1.msra.mxu0 0.0
    %1195 = vmatprep.subr.mxu0 0.0
    %1196 = vmatpush1.msra.mxu0 0.0
    %1197 = vmatprep.subr.mxu0 0.0
    %1198 = vmatpush1.msra.mxu0 0.0
    %1199 = vmatprep.subr.mxu0 0.0
    %1200 = vmatpush1.msra.mxu0 0.0
    %1201 = vmatprep.subr.mxu0 0.0
    %1202 = vmatpush1.msra.mxu0 0.0
    %1203 = vmatprep.subr.mxu0 0.0
    %1204 = vmatpush1.msra.mxu0 0.0
    %1205 = vmatprep.subr.mxu0 0.0
    %1206 = vmatpush1.msra.mxu0 0.0
    %1207 = vmatprep.subr.mxu0 0.0
    %1208 = vmatpush1.msra.mxu0 0.0
    %1209 = vmatprep.subr.mxu0 0.0
    %1210 = vmatpush1.msra.mxu0 0.0
    %1211 = vmatprep.subr.mxu0 0.0
    %1212 = vmatpush1.msra.mxu0 0.0
    %1213 = vmatprep.subr.mxu0 0.0
    %1214 = vmatpush1.msra.mxu0 0.0
    %1215 = vmatprep.subr.mxu0 0.0
    %1216 = vmatpush1.msra.mxu0 0.0
    %1217 = vmatprep.subr.mxu0 0.0
    %1218 = vmatpush1.msra.mxu0 0.0
    %1219 = vmatprep.subr.mxu0 0.0
    %1220 = vmatpush1.msra.mxu0 0.0
    %1221 = vmatprep.subr.mxu0 0.0
    %1222 = vmatpush1.msra.mxu0 0.0
    %1223 = vmatprep.subr.mxu0 0.0
    %1224 = vmatpush1.msra.mxu0 0.0
    %1225 = vmatprep.subr.mxu0 0.0
    %1226 = vmatpush1.msra.mxu0 0.0
    %1227 = vmatprep.subr.mxu0 0.0
    %1228 = vmatpush1.msra.mxu0 0.0
    %1229 = vmatprep.subr.mxu0 0.0
    %1230 = vmatpush1.msra.mxu0 0.0
    %1231 = vmatprep.subr.mxu0 0.0
    %1232 = vmatpush1.msra.mxu0 0.0
    %1233 = vmatprep.subr.mxu0 0.0
    %1234 = vmatpush1.msra.mxu0 0.0
    %1235 = vmatprep.mubr.f32.mxu0 0.0
    %1236 = vmatmul.mubr.f32.gmra.mrb[0].mxu0 %v1166
    %v1237 = vpop.f32.mrb[0].mxu0
    %v1238 = vadd.f32 %v1163, %v1237
    %v1239 = vpop.f32.mrb[0].mxu0
    %1240 = vmatprep.mubr.f32.mxu0 0.0
    %1241 = vmatmul.mubr.f32.gmra.mrb[0].mxu0 %v1169
    %v1242 = vpop.f32.mrb[0].mxu0
    %v1243 = vadd.f32 %v1163, %v1242
    %v1244 = vpop.f32.mrb[0].mxu0
    %1245 = vdwg.mxu0
    %v1246 = vadd.f32 %v659, %v1238
    %v1247 = vadd.f32 %v660, %v1243
    %v1248 = vsel %vm121, %v1246, 0.0
    %1249 = vadd.xlane.f32.xlu0 %v1248
    %v1250 = vpop.xlane.xlu0 %1249
    %v1251 = vsel %vm121, %v1247, 0.0
    %1252 = vadd.xlane.f32.xlu0 %v1251
    %v1253 = vpop.xlane.xlu0 %1252
    %v1254 = vmul.f32 %v1250, %v628
    %v1255 = vmul.f32 %v1253, %v628
    %v1256 = vsub.f32 %v1246, %v1254
    %v1257 = vsub.f32 %v1247, %v1255
    %v1258 = vmul.f32 %v1256, %v1256
    %v1259 = vmul.f32 %v1257, %v1257
    %v1260 = vsel %vm121, %v1258, 0.0
    %1261 = vadd.xlane.f32.xlu0 %v1260
    %v1262 = vpop.xlane.xlu0 %1261
    %v1263 = vsel %vm121, %v1259, 0.0
    %1264 = vadd.xlane.f32.xlu0 %v1263
    %v1265 = vpop.xlane.xlu0 %1264
    %v1266 = vmul.f32 %v1262, %v628
    %v1267 = vmul.f32 %v1265, %v628
    %v1268 = vadd.f32 %v1266, 1e-05
    %v1269 = vadd.f32 %v1267, 1e-05
    %v1270 = vrsqrt.pop %v1268
    %v1271 = vrsqrt.pop %v1269
    %v1272 = vmul.f32 %v1256, %v1270
    %v1273 = vmul.f32 %v1257, %v1271
    %v1274 = vlaneseq
    %v1275 = vshrl.u32 %v1274, 7
    %v1276 = vsub.s32 2, %v1275
    %v1277 = vrot.slane %v113, %v1276
    %v1278 = vmul.f32 %v1272, %v1277
    %v1279 = vmul.f32 %v1273, %v1277
    %v1280 = vlaneseq
    %v1281 = vshrl.u32 %v1280, 7
    %v1282 = vsub.s32 3, %v1281
    %v1283 = vrot.slane %v113, %v1282
    %v1284 = vadd.f32 %v1278, %v1283
    %v1285 = vadd.f32 %v1279, %v1283
    %v1286 = vld [vmem:[%s9] sm:$0xff]
    %1287 = vrot.lane.b32.xlu0 %v119, 64
    %v1288 = vpop.permute.xlu0 %1287
    %v1291 = vsel %vm121, %v1284, 0
    %v1294 = vsel %vm121, %v1285, 0
    %1296 = vmatprep.subr.mxu0 0.0
    %1297 = vmatpush1.msra.mxu0 %v1286
    %1298 = vmatprep.subr.mxu0 0.0
    %1299 = vmatpush1.msra.mxu0 0.0
    %1300 = vmatprep.subr.mxu0 0.0
    %1301 = vmatpush1.msra.mxu0 0.0
    %1302 = vmatprep.subr.mxu0 0.0
    %1303 = vmatpush1.msra.mxu0 0.0
    %1304 = vmatprep.subr.mxu0 0.0
    %1305 = vmatpush1.msra.mxu0 0.0
    %1306 = vmatprep.subr.mxu0 0.0
    %1307 = vmatpush1.msra.mxu0 0.0
    %1308 = vmatprep.subr.mxu0 0.0
    %1309 = vmatpush1.msra.mxu0 0.0
    %1310 = vmatprep.subr.mxu0 0.0
    %1311 = vmatpush1.msra.mxu0 0.0
    %1312 = vmatprep.subr.mxu0 0.0
    %1313 = vmatpush1.msra.mxu0 0.0
    %1314 = vmatprep.subr.mxu0 0.0
    %1315 = vmatpush1.msra.mxu0 0.0
    %1316 = vmatprep.subr.mxu0 0.0
    %1317 = vmatpush1.msra.mxu0 0.0
    %1318 = vmatprep.subr.mxu0 0.0
    %1319 = vmatpush1.msra.mxu0 0.0
    %1320 = vmatprep.subr.mxu0 0.0
    %1321 = vmatpush1.msra.mxu0 0.0
    %1322 = vmatprep.subr.mxu0 0.0
    %1323 = vmatpush1.msra.mxu0 0.0
    %1324 = vmatprep.subr.mxu0 0.0
    %1325 = vmatpush1.msra.mxu0 0.0
    %1326 = vmatprep.subr.mxu0 0.0
    %1327 = vmatpush1.msra.mxu0 0.0
    %1328 = vmatprep.subr.mxu0 0.0
    %1329 = vmatpush1.msra.mxu0 0.0
    %1330 = vmatprep.subr.mxu0 0.0
    %1331 = vmatpush1.msra.mxu0 0.0
    %1332 = vmatprep.subr.mxu0 0.0
    %1333 = vmatpush1.msra.mxu0 0.0
    %1334 = vmatprep.subr.mxu0 0.0
    %1335 = vmatpush1.msra.mxu0 0.0
    %1336 = vmatprep.subr.mxu0 0.0
    %1337 = vmatpush1.msra.mxu0 0.0
    %1338 = vmatprep.subr.mxu0 0.0
    %1339 = vmatpush1.msra.mxu0 0.0
    %1340 = vmatprep.subr.mxu0 0.0
    %1341 = vmatpush1.msra.mxu0 0.0
    %1342 = vmatprep.subr.mxu0 0.0
    %1343 = vmatpush1.msra.mxu0 0.0
    %1344 = vmatprep.subr.mxu0 0.0
    %1345 = vmatpush1.msra.mxu0 0.0
    %1346 = vmatprep.subr.mxu0 0.0
    %1347 = vmatpush1.msra.mxu0 0.0
    %1348 = vmatprep.subr.mxu0 0.0
    %1349 = vmatpush1.msra.mxu0 0.0
    %1350 = vmatprep.subr.mxu0 0.0
    %1351 = vmatpush1.msra.mxu0 0.0
    %1352 = vmatprep.subr.mxu0 0.0
    %1353 = vmatpush1.msra.mxu0 0.0
    %1354 = vmatprep.subr.mxu0 0.0
    %1355 = vmatpush1.msra.mxu0 0.0
    %1356 = vmatprep.subr.mxu0 0.0
    %1357 = vmatpush1.msra.mxu0 0.0
    %1358 = vmatprep.subr.mxu0 0.0
    %1359 = vmatpush1.msra.mxu0 0.0
    %1360 = vmatprep.mubr.f32.mxu0 0.0
    %1361 = vmatmul.mubr.f32.gmra.mrb[0].mxu0 %v1291
    %v1362 = vpop.f32.mrb[0].mxu0
    %v1363 = vadd.f32 %v1288, %v1362
    %v1364 = vpop.f32.mrb[0].mxu0
    %1365 = vmatprep.mubr.f32.mxu0 0.0
    %1366 = vmatmul.mubr.f32.gmra.mrb[0].mxu0 %v1294
    %v1367 = vpop.f32.mrb[0].mxu0
    %v1368 = vadd.f32 %v1288, %v1367
    %v1369 = vpop.f32.mrb[0].mxu0
    %1370 = vdwg.mxu0
    %v1371 = vmax.f32 %v1363, 0.0
    %v1372 = vmax.f32 %v1368, 0.0
    %v1373 = vld [vmem:[%s10] sm:$0xff]
    %v1374 = vld [vmem:[%s10 + $0x8] sm:$0xff]
    %v1375 = vld [vmem:[%s10 + $0x10] sm:$0xff]
    %v1376 = vld [vmem:[%s10 + $0x18] sm:$0xff]
    %1377 = vrot.lane.b32.xlu0 %v119, 32
    %v1378 = vpop.permute.xlu0 %1377
    %vm1380 = vcmask 261120
    %v1382 = vsel %vm1380, %v1371, 0
    %v1385 = vsel %vm1380, %v1372, 0
    %1387 = vmatprep.subr.mxu0 0.0
    %1388 = vmatpush1.msra.mxu0 %v1373
    %1389 = vmatprep.subr.mxu0 0.0
    %1390 = vmatpush1.msra.mxu0 %v1374
    %1391 = vmatprep.subr.mxu0 0.0
    %1392 = vmatpush1.msra.mxu0 %v1375
    %1393 = vmatprep.subr.mxu0 0.0
    %1394 = vmatpush1.msra.mxu0 %v1376
    %1395 = vmatprep.subr.mxu0 0.0
    %1396 = vmatpush1.msra.mxu0 0.0
    %1397 = vmatprep.subr.mxu0 0.0
    %1398 = vmatpush1.msra.mxu0 0.0
    %1399 = vmatprep.subr.mxu0 0.0
    %1400 = vmatpush1.msra.mxu0 0.0
    %1401 = vmatprep.subr.mxu0 0.0
    %1402 = vmatpush1.msra.mxu0 0.0
    %1403 = vmatprep.subr.mxu0 0.0
    %1404 = vmatpush1.msra.mxu0 0.0
    %1405 = vmatprep.subr.mxu0 0.0
    %1406 = vmatpush1.msra.mxu0 0.0
    %1407 = vmatprep.subr.mxu0 0.0
    %1408 = vmatpush1.msra.mxu0 0.0
    %1409 = vmatprep.subr.mxu0 0.0
    %1410 = vmatpush1.msra.mxu0 0.0
    %1411 = vmatprep.subr.mxu0 0.0
    %1412 = vmatpush1.msra.mxu0 0.0
    %1413 = vmatprep.subr.mxu0 0.0
    %1414 = vmatpush1.msra.mxu0 0.0
    %1415 = vmatprep.subr.mxu0 0.0
    %1416 = vmatpush1.msra.mxu0 0.0
    %1417 = vmatprep.subr.mxu0 0.0
    %1418 = vmatpush1.msra.mxu0 0.0
    %1419 = vmatprep.subr.mxu0 0.0
    %1420 = vmatpush1.msra.mxu0 0.0
    %1421 = vmatprep.subr.mxu0 0.0
    %1422 = vmatpush1.msra.mxu0 0.0
    %1423 = vmatprep.subr.mxu0 0.0
    %1424 = vmatpush1.msra.mxu0 0.0
    %1425 = vmatprep.subr.mxu0 0.0
    %1426 = vmatpush1.msra.mxu0 0.0
    %1427 = vmatprep.subr.mxu0 0.0
    %1428 = vmatpush1.msra.mxu0 0.0
    %1429 = vmatprep.subr.mxu0 0.0
    %1430 = vmatpush1.msra.mxu0 0.0
    %1431 = vmatprep.subr.mxu0 0.0
    %1432 = vmatpush1.msra.mxu0 0.0
    %1433 = vmatprep.subr.mxu0 0.0
    %1434 = vmatpush1.msra.mxu0 0.0
    %1435 = vmatprep.subr.mxu0 0.0
    %1436 = vmatpush1.msra.mxu0 0.0
    %1437 = vmatprep.subr.mxu0 0.0
    %1438 = vmatpush1.msra.mxu0 0.0
    %1439 = vmatprep.subr.mxu0 0.0
    %1440 = vmatpush1.msra.mxu0 0.0
    %1441 = vmatprep.subr.mxu0 0.0
    %1442 = vmatpush1.msra.mxu0 0.0
    %1443 = vmatprep.subr.mxu0 0.0
    %1444 = vmatpush1.msra.mxu0 0.0
    %1445 = vmatprep.subr.mxu0 0.0
    %1446 = vmatpush1.msra.mxu0 0.0
    %1447 = vmatprep.subr.mxu0 0.0
    %1448 = vmatpush1.msra.mxu0 0.0
    %1449 = vmatprep.subr.mxu0 0.0
    %1450 = vmatpush1.msra.mxu0 0.0
    %1451 = vmatprep.mubr.f32.mxu0 0.0
    %1452 = vmatmul.mubr.f32.gmra.mrb[0].mxu0 %v1382
    %v1453 = vpop.f32.mrb[0].mxu0
    %v1454 = vadd.f32 %v1378, %v1453
    %v1455 = vpop.f32.mrb[0].mxu0
    %1456 = vmatprep.mubr.f32.mxu0 0.0
    %1457 = vmatmul.mubr.f32.gmra.mrb[0].mxu0 %v1385
    %v1458 = vpop.f32.mrb[0].mxu0
    %v1459 = vadd.f32 %v1378, %v1458
    %v1460 = vpop.f32.mrb[0].mxu0
    %1461 = vdwg.mxu0
    %v1462 = vadd.f32 %v1284, %v1454
    %v1463 = vadd.f32 %v1285, %v1459
    %v1464 = vsel %vm121, %v1462, 0.0
    %1465 = vadd.xlane.f32.xlu0 %v1464
    %v1466 = vpop.xlane.xlu0 %1465
    %v1467 = vsel %vm121, %v1463, 0.0
    %1468 = vadd.xlane.f32.xlu0 %v1467
    %v1469 = vpop.xlane.xlu0 %1468
    %v1470 = vmul.f32 %v1466, %v628
    %v1471 = vmul.f32 %v1469, %v628
    %v1472 = vsub.f32 %v1462, %v1470
    %v1473 = vsub.f32 %v1463, %v1471
    %v1474 = vmul.f32 %v1472, %v1472
    %v1475 = vmul.f32 %v1473, %v1473
    %v1476 = vsel %vm121, %v1474, 0.0
    %1477 = vadd.xlane.f32.xlu0 %v1476
    %v1478 = vpop.xlane.xlu0 %1477
    %v1479 = vsel %vm121, %v1475, 0.0
    %1480 = vadd.xlane.f32.xlu0 %v1479
    %v1481 = vpop.xlane.xlu0 %1480
    %v1482 = vmul.f32 %v1478, %v628
    %v1483 = vmul.f32 %v1481, %v628
    %v1484 = vadd.f32 %v1482, 1e-05
    %v1485 = vadd.f32 %v1483, 1e-05
    %v1486 = vrsqrt.pop %v1484
    %v1487 = vrsqrt.pop %v1485
    %v1488 = vmul.f32 %v1472, %v1486
    %v1489 = vmul.f32 %v1473, %v1487
    %v1490 = vlaneseq
    %v1491 = vshrl.u32 %v1490, 7
    %v1492 = vsub.s32 4, %v1491
    %v1493 = vrot.slane %v113, %v1492
    %v1494 = vmul.f32 %v1488, %v1493
    %v1495 = vmul.f32 %v1489, %v1493
    %v1496 = vlaneseq
    %v1497 = vshrl.u32 %v1496, 7
    %v1498 = vsub.s32 5, %v1497
    %v1499 = vrot.slane %v113, %v1498
    %v1500 = vadd.f32 %v1494, %v1499
    %v1501 = vadd.f32 %v1495, %v1499
    %1502 = vst.msk [vmem:[#allocation10] sm:$0xff] %vm121, %v1500
    %1503 = vst.msk [vmem:[#allocation10 + $0x8] sm:$0xff] %vm121, %v1501
    // Predicated region
    $region70: #{tpu_custom_call.1} parent=1 // pred_check
      _
    $region71: #{tpu_custom_call.1} parent=1 // pred_check_branch
      %1505 = sbr.rel (0) target = $region73
    $region72: #{tpu_custom_call.1} parent=1 // pred_region
      %s1507 = ssub.s32 256, 256
      %1508 = vsyncadd [#allocation4], %s1507
      %s1509 = sshll.u32 [#allocation10], 4
      %s1510 = int_to_ptr.vmem [resolvable:$true] %s1509
      %1515 = dma.vmem_to_hbm [thread:$0]  %s1510, 256, %s13, [#allocation4], 128, 128, 8
    $region73: #{tpu_custom_call.1} parent=1 // pred_fallthru
      _
    // Predicated region
    $region74: #{tpu_custom_call.1} parent=1 // pred_check
      _
    $region75: #{tpu_custom_call.1} parent=1 // pred_check_branch
      %1517 = sbr.rel (0) target = $region77
    $region76: #{tpu_custom_call.1} parent=1 // pred_region
      %1518 = dma.done [#allocation4], 256
    $region77: #{tpu_custom_call.1} parent=1 // pred_fallthru
      _
    %1519 = vsyncpa [#allocation3], 1
    %1520 = vsyncpa [#allocation6], 1
    %1521 = vsyncpa [#allocation9], 1
    %1522 = vsyncpa [#allocation4], 1

</llo_original>
